<compile_context>
chip_gen: v5e
topology: v5e:2x2
jax: 0.10.0
libtpu: 0.0.40
codegen_flags: <defaults>
</compile_context>

<pallas_src>
import functools

import numpy as np
import jax
import jax.numpy as jnp
from jax.experimental import pallas as pl
from jax.experimental.pallas import tpu as pltpu

_H = 16          # hard-coded in the reference module
_W = 16
_HW = _H * _W
_COUT = 64       # Conv2d(..., 64, ...)


def _round8(n):
    return ((n + 7) // 8) * 8


def _round_up(n, m):
    return ((n + m - 1) // m) * m


# ----------------------------------------------------------------------------
# Host-side construction of the small linear-operator constants (numpy, static)
# ----------------------------------------------------------------------------
def _pool_matrix(k, P):
    """(P*P, 256): non-overlapping k x k average pooling of a flattened 16x16 map."""
    A = np.zeros((P * P, _HW), np.float32)
    inv = 1.0 / (k * k)
    for ih in range(P):
        for iw in range(P):
            for dh in range(k):
                for dw in range(k):
                    A[ih * P + iw, (ih * k + dh) * _W + (iw * k + dw)] = inv
    return A


def _tap_matrices(k, P, Q):
    """(9, 256, Q*Q): per conv tap kk=kh*3+kw, the (avgpool o zero-padded gather) map.

    Tap kk of a 3x3/stride-2/pad-1 conv reads pooled pixel (2*oh+kh-1, 2*ow+kw-1)
    for conv output (oh, ow); out-of-range (zero padding) columns stay zero.
    """
    pool = _pool_matrix(k, P)
    M = np.zeros((9, _HW, Q * Q), np.float32)
    for kh in range(3):
        for kw in range(3):
            kk = kh * 3 + kw
            for oh in range(Q):
                for ow in range(Q):
                    ih = oh * 2 + kh - 1
                    iw = ow * 2 + kw - 1
                    if 0 <= ih < P and 0 <= iw < P:
                        M[kk, :, oh * Q + ow] = pool[ih * P + iw, :]
    return M


def _upsample_1d(in_size, out_size):
    """PyTorch bilinear align_corners=False interpolation matrix (out_size, in_size)."""
    A = np.zeros((out_size, in_size), np.float32)
    scale = in_size / out_size
    for i in range(out_size):
        src = max((i + 0.5) * scale - 0.5, 0.0)
        i0 = min(int(np.floor(src)), in_size - 1)
        i1 = min(i0 + 1, in_size - 1)
        lam = src - i0
        A[i, i0] += 1.0 - lam
        A[i, i1] += lam
    return A


def _upsample_2d_t(Q):
    """(Q*Q, 256): transposed 2D bilinear upsample (Q,Q) -> (16,16)."""
    A = _upsample_1d(Q, _H)                     # (16, Q)
    U = np.kron(A, A)                           # (256, Q*Q)
    return np.ascontiguousarray(U.T.astype(np.float32))


# ----------------------------------------------------------------------------
# Pallas kernel: T images per grid step, all taps / branches / stages fused
# ----------------------------------------------------------------------------
def _pyramid_kernel(x_ref, mt_ref, w_ref, ut_ref, bias_ref, o_ref, *,
                    T, C, Cp, B, segqp):
    """x_ref   : (T, Cp, 256)        channel-major flattened input (zero-padded channels)
       mt_ref  : (256, 9*segqp)      all taps x all branches, tap groups 128-lane aligned
       w_ref   : (B*64, 9*Cp)        conv weights, all branches stacked along rows
       ut_ref  : (B, segqp, 256)     per-branch upsample (rows outside the branch's q2 = 0)
       bias_ref: (B*64, 1)
       o_ref   : (T, C + B*64, 256)  fused [x, branches] channel concat
    """
    xb = x_ref[...]                                                 # (T, Cp, 256)

    # stage 0: x pass-through (fused channel concat)
    for i in range(T):
        o_ref[i, 0:C, :] = xb[i, 0:C, :].astype(o_ref.dtype)

    # stage 1: one wide matmul for all taps/branches/images
    x2 = xb.reshape(T * Cp, _HW)                                    # (T*Cp, 256)
    s = jnp.dot(x2, mt_ref[...],
                preferred_element_type=jnp.float32)                 # (T*Cp, 9*segqp)

    # stage 2: per image, ONE K=9*Cp matmul covering all branches
    w_all = w_ref[...]                                              # (B*64, 9*Cp)
    bias = bias_ref[...]                                            # (B*64, 1)
    accs = []
    for i in range(T):
        parts = [s[i * Cp:(i + 1) * Cp, kk * segqp:(kk + 1) * segqp]
                 for kk in range(9)]                                # 9 x (Cp, segqp), aligned
        r_i = jnp.concatenate(parts, axis=0)                        # (9*Cp, segqp)
        # bias folded before the upsample (interp weights per output pixel sum to 1)
        accs.append(jnp.dot(w_all, r_i,
                            preferred_element_type=jnp.float32) + bias)   # (B*64, segqp)

    # stage 3: per branch, one upsample matmul batched over the T images
    for b in range(B):
        acc_b = jnp.concatenate(
            [a[b * _COUT:(b + 1) * _COUT, :] for a in accs], axis=0)      # (T*64, segqp)
        up_b = jnp.dot(acc_b, ut_ref[b],
                       preferred_element_type=jnp.float32)                # (T*64, 256)
        for i in range(T):
            o_ref[i, C + b * _COUT: C + (b + 1) * _COUT, :] = (
                up_b[i * _COUT:(i + 1) * _COUT, :].astype(o_ref.dtype))


# ----------------------------------------------------------------------------
# Module wrapper (deterministic synthetic parameters)
# ----------------------------------------------------------------------------
class PyramidPoolingBlockPallas:
    def __init__(self, key, in_channels, bin_sizes, batch_tile=8):
        self.in_channels = C = in_channels
        self.bin_sizes = tuple(bin_sizes)
        self.c_pad = Cp = _round8(C)
        self.batch_tile = batch_tile
        B = len(self.bin_sizes)

        # geometry per branch
        geoms = []
        for bs in self.bin_sizes:
            k = _W // bs
            P = (_W - k) // k + 1                 # AvgPool2d output size
            Q = (P - 1) // 2 + 1                  # Conv2d(3, stride 2, pad 1) output size
            geoms.append((k, P, Q))
        allocs = [_round8(Q * Q) for (_, _, Q) in geoms]
        offs = [int(v) for v in np.cumsum([0] + allocs[:-1])]
        self.segqp = segqp = max(128, _round_up(int(sum(allocs)), 128))

        mt_all = np.zeros((_HW, 9 * segqp), np.float32)
        w_all = np.zeros((B * _COUT, 9 * Cp), np.float32)
        ut_all = np.zeros((B, segqp, _HW), np.float32)
        bias_all = np.zeros((B * _COUT, 1), np.float32)

        keys = jax.random.split(key, B)
        self.conv_params = []                     # (w_hwio, bias) for the pure-JAX reference
        for b, ((k, P, Q), k_b) in enumerate(zip(geoms, keys)):
            kw_key, kb_key = jax.random.split(k_b)
            bound = 1.0 / np.sqrt(9 * C)
            w_hwio = jax.random.uniform(kw_key, (3, 3, C, _COUT), jnp.float32, -bound, bound)
            bias = jax.random.uniform(kb_key, (_COUT,), jnp.float32, -bound, bound)
            self.conv_params.append((w_hwio, bias))

            q2 = Q * Q
            off = offs[b]
            taps = _tap_matrices(k, P, Q)                               # (9, 256, q2)
            for kk in range(9):
                mt_all[:, kk * segqp + off: kk * segqp + off + q2] = taps[kk]

            w_np = np.asarray(w_hwio)
            for kh in range(3):
                for kw in range(3):
                    kk = kh * 3 + kw
                    w_all[b * _COUT:(b + 1) * _COUT, kk * Cp: kk * Cp + C] = w_np[kh, kw].T

            ut = _upsample_2d_t(Q)                                      # (q2, 256)
            # bias is folded before the upsample; valid only if per-pixel weights sum to 1
            assert np.allclose(ut.sum(axis=0), 1.0, atol=1e-5)
            ut_all[b, off:off + q2, :] = ut
            bias_all[b * _COUT:(b + 1) * _COUT, 0] = np.asarray(bias)

        self.mt_all = jnp.asarray(mt_all)
        self.w_all = jnp.asarray(w_all)
        self.ut_all = jnp.asarray(ut_all)
        self.bias_all = jnp.asarray(bias_all)

    def __call__(self, x_nchw):
        N, C, H, W = x_nchw.shape
        assert (H, W) == (_H, _W) and C == self.in_channels
        B = len(self.bin_sizes)
        Cp = self.c_pad
        T = max(1, min(self.batch_tile, N))
        Np = _round_up(N, T)
        CTOT = C + B * _COUT

        x_flat = x_nchw.reshape(N, C, _HW)                 # channel-major, no transpose
        if Cp != C or Np != N:
            x_flat = jnp.pad(x_flat, ((0, Np - N), (0, Cp - C), (0, 0)))

        kernel = functools.partial(_pyramid_kernel, T=T, C=C, Cp=Cp, B=B, segqp=self.segqp)
        out = pl.pallas_call(
            kernel,
            out_shape=jax.ShapeDtypeStruct((Np, CTOT, _HW), jnp.float32),
            grid=(Np // T,),
            in_specs=[
                pl.BlockSpec((T, Cp, _HW), lambda n: (n, 0, 0)),
                pl.BlockSpec(self.mt_all.shape, lambda n: (0, 0)),
                pl.BlockSpec(self.w_all.shape, lambda n: (0, 0)),
                pl.BlockSpec(self.ut_all.shape, lambda n: (0, 0, 0)),
                pl.BlockSpec(self.bias_all.shape, lambda n: (0, 0)),
            ],
            out_specs=pl.BlockSpec((T, CTOT, _HW), lambda n: (n, 0, 0)),
            compiler_params=pltpu.CompilerParams(
                dimension_semantics=("parallel",),
                vmem_limit_bytes=32 * 1024 * 1024),
        )(x_flat, self.mt_all, self.w_all, self.ut_all, self.bias_all)

        if Np != N:
            out = out[:N]
        return out.reshape(N, CTOT, _H, _W)                # pure reshape, already NCHW order


# ----------------------------------------------------------------------------
# Pure-JAX reference for correctness validation
# ----------------------------------------------------------------------------
def _ref_pyramid(x_nchw, conv_params, bin_sizes):
    outs = [x_nchw]
    for (w_hwio, bias), bs in zip(conv_params, bin_sizes):
        k = _W // bs
        pooled = jax.lax.reduce_window(
            x_nchw, 0.0, jax.lax.add, (1, 1, k, k), (1, 1, k, k), "VALID") / float(k * k)
        conv = jax.lax.conv_general_dilated(
            pooled, w_hwio, (2, 2), [(1, 1), (1, 1)],
            dimension_numbers=("NCHW", "HWIO", "NCHW"))
        conv = conv + bias[None, :, None, None]
        up = jax.image.resize(conv, (conv.shape[0], conv.shape[1], _H, _W),
                              method="bilinear")
        outs.append(up)
    return jnp.concatenate(outs, axis=1)


if __name__ == "__main__":
    key = jax.random.PRNGKey(0)
    k_x, k_blk = jax.random.split(key)

    bin_sizes = (1, 2, 3, 6)
    x = jax.random.normal(k_x, (2, 4, _H, _W), jnp.float32)          # NCHW, spatial fixed at 16

    block = PyramidPoolingBlockPallas(k_blk, in_channels=4, bin_sizes=bin_sizes)
    fwd = jax.jit(block.__call__)
    y = jax.block_until_ready(fwd(x))
    assert y.shape == (2, 4 + _COUT * len(bin_sizes), _H, _W)

    ref = jax.block_until_ready(_ref_pyramid(x, block.conv_params, bin_sizes))
    np.testing.assert_allclose(np.asarray(y), np.asarray(ref), rtol=1e-3, atol=1e-3)

    print("KERNEL_OK")
</pallas_src>

<mosaic_0001>
module attributes {stable_mosaic.version = 11 : i64} {
  func.func @_pyramid_kernel(%arg0: i32, %arg1: memref<2x8x256xf32, #tpu.memory_space<vmem>>, %arg2: memref<256x1152xf32, #tpu.memory_space<vmem>>, %arg3: memref<256x72xf32, #tpu.memory_space<vmem>>, %arg4: memref<4x128x256xf32, #tpu.memory_space<vmem>>, %arg5: memref<256x1xf32, #tpu.memory_space<vmem>>, %arg6: memref<2x260x256xf32, #tpu.memory_space<vmem>>) attributes {dimension_semantics = [#tpu.dimension_semantics<parallel>], iteration_bounds = array<i64: 1>, scalar_prefetch = 0 : i64, scratch_operands = 0 : i64, tpu.core_type = #tpu.core_type<tc>, window_params = [{transform_indices = @transform_0, window_bounds = array<i64: 2, 8, 256>}, {pipeline_mode = #tpu.pipeline_mode<synchronous>, transform_indices = @transform_1, window_bounds = array<i64: 256, 1152>}, {pipeline_mode = #tpu.pipeline_mode<synchronous>, transform_indices = @transform_2, window_bounds = array<i64: 256, 72>}, {pipeline_mode = #tpu.pipeline_mode<synchronous>, transform_indices = @transform_3, window_bounds = array<i64: 4, 128, 256>}, {pipeline_mode = #tpu.pipeline_mode<synchronous>, transform_indices = @transform_4, window_bounds = array<i64: 256, 1>}, {transform_indices = @transform_5, window_bounds = array<i64: 2, 260, 256>}]} {
    %c0 = arith.constant 0 : index
    %c0_0 = arith.constant 0 : index
    %c0_1 = arith.constant 0 : index
    %0 = vector.load %arg1[%c0, %c0_0, %c0_1] : memref<2x8x256xf32, #tpu.memory_space<vmem>>, vector<2x8x256xf32>
    %1 = vector.extract_strided_slice %0 {offsets = [0, 0, 0], sizes = [1, 4, 256], strides = [1, 1, 1]} : vector<2x8x256xf32> to vector<1x4x256xf32>
    %2 = vector.shape_cast %1 : vector<1x4x256xf32> to vector<4x256xf32>
    %c0_2 = arith.constant 0 : index
    %c0_3 = arith.constant 0 : index
    %c0_4 = arith.constant 0 : index
    %3 = vector.load %arg6[%c0_2, %c0_3, %c0_4] : memref<2x260x256xf32, #tpu.memory_space<vmem>>, vector<1x4x256xf32>
    %4 = vector.shape_cast %3 : vector<1x4x256xf32> to vector<4x256xf32>
    %5 = vector.shape_cast %2 : vector<4x256xf32> to vector<1x4x256xf32>
    tpu.vector_store %arg6[%c0_2, %c0_3, %c0_4], %5 {strides = array<i32>} : memref<2x260x256xf32, #tpu.memory_space<vmem>>, vector<1x4x256xf32>,
    %6 = vector.extract_strided_slice %0 {offsets = [1, 0, 0], sizes = [1, 4, 256], strides = [1, 1, 1]} : vector<2x8x256xf32> to vector<1x4x256xf32>
    %7 = vector.shape_cast %6 : vector<1x4x256xf32> to vector<4x256xf32>
    %c1 = arith.constant 1 : index
    %c0_5 = arith.constant 0 : index
    %c0_6 = arith.constant 0 : index
    %8 = vector.load %arg6[%c1, %c0_5, %c0_6] : memref<2x260x256xf32, #tpu.memory_space<vmem>>, vector<1x4x256xf32>
    %9 = vector.shape_cast %8 : vector<1x4x256xf32> to vector<4x256xf32>
    %10 = vector.shape_cast %7 : vector<4x256xf32> to vector<1x4x256xf32>
    tpu.vector_store %arg6[%c1, %c0_5, %c0_6], %10 {strides = array<i32>} : memref<2x260x256xf32, #tpu.memory_space<vmem>>, vector<1x4x256xf32>,
    %11 = vector.shape_cast %0 : vector<2x8x256xf32> to vector<16x256xf32>
    %c0_7 = arith.constant 0 : index
    %c0_8 = arith.constant 0 : index
    %12 = vector.load %arg2[%c0_7, %c0_8] : memref<256x1152xf32, #tpu.memory_space<vmem>>, vector<256x1152xf32>
    %cst = arith.constant dense<0.000000e+00> : vector<16x1152xf32>
    %13 = tpu.matmul %11, %12, %cst {dimension_numbers = #tpu.dot_dimension_numbers<[1], [0], [0], [1], [0, 0, 1, 1], [], []>} : vector<16x256xf32>, vector<256x1152xf32>, vector<16x1152xf32> -> vector<16x1152xf32>
    %c0_9 = arith.constant 0 : index
    %c0_10 = arith.constant 0 : index
    %14 = vector.load %arg3[%c0_9, %c0_10] : memref<256x72xf32, #tpu.memory_space<vmem>>, vector<256x72xf32>
    %c0_11 = arith.constant 0 : index
    %c0_12 = arith.constant 0 : index
    %15 = vector.load %arg5[%c0_11, %c0_12] : memref<256x1xf32, #tpu.memory_space<vmem>>, vector<256x1xf32>
    %16 = vector.extract_strided_slice %13 {offsets = [0, 0], sizes = [8, 128], strides = [1, 1]} : vector<16x1152xf32> to vector<8x128xf32>
    %17 = vector.extract_strided_slice %13 {offsets = [0, 128], sizes = [8, 128], strides = [1, 1]} : vector<16x1152xf32> to vector<8x128xf32>
    %18 = vector.extract_strided_slice %13 {offsets = [0, 256], sizes = [8, 128], strides = [1, 1]} : vector<16x1152xf32> to vector<8x128xf32>
    %19 = vector.extract_strided_slice %13 {offsets = [0, 384], sizes = [8, 128], strides = [1, 1]} : vector<16x1152xf32> to vector<8x128xf32>
    %20 = vector.extract_strided_slice %13 {offsets = [0, 512], sizes = [8, 128], strides = [1, 1]} : vector<16x1152xf32> to vector<8x128xf32>
    %21 = vector.extract_strided_slice %13 {offsets = [0, 640], sizes = [8, 128], strides = [1, 1]} : vector<16x1152xf32> to vector<8x128xf32>
    %22 = vector.extract_strided_slice %13 {offsets = [0, 768], sizes = [8, 128], strides = [1, 1]} : vector<16x1152xf32> to vector<8x128xf32>
    %23 = vector.extract_strided_slice %13 {offsets = [0, 896], sizes = [8, 128], strides = [1, 1]} : vector<16x1152xf32> to vector<8x128xf32>
    %24 = vector.extract_strided_slice %13 {offsets = [0, 1024], sizes = [8, 128], strides = [1, 1]} : vector<16x1152xf32> to vector<8x128xf32>
    %25 = tpu.concatenate %16, %17, %18, %19, %20, %21, %22, %23, %24 in 0 : vector<8x128xf32>, vector<8x128xf32>, vector<8x128xf32>, vector<8x128xf32>, vector<8x128xf32>, vector<8x128xf32>, vector<8x128xf32>, vector<8x128xf32>, vector<8x128xf32> -> vector<72x128xf32>
    %cst_13 = arith.constant dense<0.000000e+00> : vector<256x128xf32>
    %26 = tpu.matmul %14, %25, %cst_13 {dimension_numbers = #tpu.dot_dimension_numbers<[1], [0], [0], [1], [0, 0, 1, 1], [], []>} : vector<256x72xf32>, vector<72x128xf32>, vector<256x128xf32> -> vector<256x128xf32>
    %27 = vector.broadcast %15 : vector<256x1xf32> to vector<256x128xf32>
    %28 = arith.addf %26, %27 : vector<256x128xf32>
    %29 = vector.extract_strided_slice %13 {offsets = [8, 0], sizes = [8, 128], strides = [1, 1]} : vector<16x1152xf32> to vector<8x128xf32>
    %30 = vector.extract_strided_slice %13 {offsets = [8, 128], sizes = [8, 128], strides = [1, 1]} : vector<16x1152xf32> to vector<8x128xf32>
    %31 = vector.extract_strided_slice %13 {offsets = [8, 256], sizes = [8, 128], strides = [1, 1]} : vector<16x1152xf32> to vector<8x128xf32>
    %32 = vector.extract_strided_slice %13 {offsets = [8, 384], sizes = [8, 128], strides = [1, 1]} : vector<16x1152xf32> to vector<8x128xf32>
    %33 = vector.extract_strided_slice %13 {offsets = [8, 512], sizes = [8, 128], strides = [1, 1]} : vector<16x1152xf32> to vector<8x128xf32>
    %34 = vector.extract_strided_slice %13 {offsets = [8, 640], sizes = [8, 128], strides = [1, 1]} : vector<16x1152xf32> to vector<8x128xf32>
    %35 = vector.extract_strided_slice %13 {offsets = [8, 768], sizes = [8, 128], strides = [1, 1]} : vector<16x1152xf32> to vector<8x128xf32>
    %36 = vector.extract_strided_slice %13 {offsets = [8, 896], sizes = [8, 128], strides = [1, 1]} : vector<16x1152xf32> to vector<8x128xf32>
    %37 = vector.extract_strided_slice %13 {offsets = [8, 1024], sizes = [8, 128], strides = [1, 1]} : vector<16x1152xf32> to vector<8x128xf32>
    %38 = tpu.concatenate %29, %30, %31, %32, %33, %34, %35, %36, %37 in 0 : vector<8x128xf32>, vector<8x128xf32>, vector<8x128xf32>, vector<8x128xf32>, vector<8x128xf32>, vector<8x128xf32>, vector<8x128xf32>, vector<8x128xf32>, vector<8x128xf32> -> vector<72x128xf32>
    %cst_14 = arith.constant dense<0.000000e+00> : vector<256x128xf32>
    %39 = tpu.matmul %14, %38, %cst_14 {dimension_numbers = #tpu.dot_dimension_numbers<[1], [0], [0], [1], [0, 0, 1, 1], [], []>} : vector<256x72xf32>, vector<72x128xf32>, vector<256x128xf32> -> vector<256x128xf32>
    %40 = vector.broadcast %15 : vector<256x1xf32> to vector<256x128xf32>
    %41 = arith.addf %39, %40 : vector<256x128xf32>
    %42 = vector.extract_strided_slice %28 {offsets = [0, 0], sizes = [64, 128], strides = [1, 1]} : vector<256x128xf32> to vector<64x128xf32>
    %43 = vector.extract_strided_slice %41 {offsets = [0, 0], sizes = [64, 128], strides = [1, 1]} : vector<256x128xf32> to vector<64x128xf32>
    %44 = tpu.concatenate %42, %43 in 0 : vector<64x128xf32>, vector<64x128xf32> -> vector<128x128xf32>
    %c0_15 = arith.constant 0 : index
    %c0_16 = arith.constant 0 : index
    %c0_17 = arith.constant 0 : index
    %45 = vector.load %arg4[%c0_15, %c0_16, %c0_17] : memref<4x128x256xf32, #tpu.memory_space<vmem>>, vector<1x128x256xf32>
    %46 = vector.shape_cast %45 : vector<1x128x256xf32> to vector<128x256xf32>
    %cst_18 = arith.constant dense<0.000000e+00> : vector<128x256xf32>
    %47 = tpu.matmul %44, %46, %cst_18 {dimension_numbers = #tpu.dot_dimension_numbers<[1], [0], [0], [1], [0, 0, 1, 1], [], []>} : vector<128x128xf32>, vector<128x256xf32>, vector<128x256xf32> -> vector<128x256xf32>
    %48 = vector.extract_strided_slice %47 {offsets = [0, 0], sizes = [64, 256], strides = [1, 1]} : vector<128x256xf32> to vector<64x256xf32>
    %c0_19 = arith.constant 0 : index
    %c4 = arith.constant 4 : index
    %c0_20 = arith.constant 0 : index
    %49 = vector.load %arg6[%c0_19, %c4, %c0_20] : memref<2x260x256xf32, #tpu.memory_space<vmem>>, vector<1x64x256xf32>
    %50 = vector.shape_cast %49 : vector<1x64x256xf32> to vector<64x256xf32>
    %51 = vector.shape_cast %48 : vector<64x256xf32> to vector<1x64x256xf32>
    tpu.vector_store %arg6[%c0_19, %c4, %c0_20], %51 {strides = array<i32>} : memref<2x260x256xf32, #tpu.memory_space<vmem>>, vector<1x64x256xf32>,
    %52 = vector.extract_strided_slice %47 {offsets = [64, 0], sizes = [64, 256], strides = [1, 1]} : vector<128x256xf32> to vector<64x256xf32>
    %c1_21 = arith.constant 1 : index
    %c4_22 = arith.constant 4 : index
    %c0_23 = arith.constant 0 : index
    %53 = vector.load %arg6[%c1_21, %c4_22, %c0_23] : memref<2x260x256xf32, #tpu.memory_space<vmem>>, vector<1x64x256xf32>
    %54 = vector.shape_cast %53 : vector<1x64x256xf32> to vector<64x256xf32>
    %55 = vector.shape_cast %52 : vector<64x256xf32> to vector<1x64x256xf32>
    tpu.vector_store %arg6[%c1_21, %c4_22, %c0_23], %55 {strides = array<i32>} : memref<2x260x256xf32, #tpu.memory_space<vmem>>, vector<1x64x256xf32>,
    %56 = vector.extract_strided_slice %28 {offsets = [64, 0], sizes = [64, 128], strides = [1, 1]} : vector<256x128xf32> to vector<64x128xf32>
    %57 = vector.extract_strided_slice %41 {offsets = [64, 0], sizes = [64, 128], strides = [1, 1]} : vector<256x128xf32> to vector<64x128xf32>
    %58 = tpu.concatenate %56, %57 in 0 : vector<64x128xf32>, vector<64x128xf32> -> vector<128x128xf32>
    %c1_24 = arith.constant 1 : index
    %c0_25 = arith.constant 0 : index
    %c0_26 = arith.constant 0 : index
    %59 = vector.load %arg4[%c1_24, %c0_25, %c0_26] : memref<4x128x256xf32, #tpu.memory_space<vmem>>, vector<1x128x256xf32>
    %60 = vector.shape_cast %59 : vector<1x128x256xf32> to vector<128x256xf32>
    %cst_27 = arith.constant dense<0.000000e+00> : vector<128x256xf32>
    %61 = tpu.matmul %58, %60, %cst_27 {dimension_numbers = #tpu.dot_dimension_numbers<[1], [0], [0], [1], [0, 0, 1, 1], [], []>} : vector<128x128xf32>, vector<128x256xf32>, vector<128x256xf32> -> vector<128x256xf32>
    %62 = vector.extract_strided_slice %61 {offsets = [0, 0], sizes = [64, 256], strides = [1, 1]} : vector<128x256xf32> to vector<64x256xf32>
    %c0_28 = arith.constant 0 : index
    %c68 = arith.constant 68 : index
    %c0_29 = arith.constant 0 : index
    %63 = vector.load %arg6[%c0_28, %c68, %c0_29] : memref<2x260x256xf32, #tpu.memory_space<vmem>>, vector<1x64x256xf32>
    %64 = vector.shape_cast %63 : vector<1x64x256xf32> to vector<64x256xf32>
    %65 = vector.shape_cast %62 : vector<64x256xf32> to vector<1x64x256xf32>
    tpu.vector_store %arg6[%c0_28, %c68, %c0_29], %65 {strides = array<i32>} : memref<2x260x256xf32, #tpu.memory_space<vmem>>, vector<1x64x256xf32>,
    %66 = vector.extract_strided_slice %61 {offsets = [64, 0], sizes = [64, 256], strides = [1, 1]} : vector<128x256xf32> to vector<64x256xf32>
    %c1_30 = arith.constant 1 : index
    %c68_31 = arith.constant 68 : index
    %c0_32 = arith.constant 0 : index
    %67 = vector.load %arg6[%c1_30, %c68_31, %c0_32] : memref<2x260x256xf32, #tpu.memory_space<vmem>>, vector<1x64x256xf32>
    %68 = vector.shape_cast %67 : vector<1x64x256xf32> to vector<64x256xf32>
    %69 = vector.shape_cast %66 : vector<64x256xf32> to vector<1x64x256xf32>
    tpu.vector_store %arg6[%c1_30, %c68_31, %c0_32], %69 {strides = array<i32>} : memref<2x260x256xf32, #tpu.memory_space<vmem>>, vector<1x64x256xf32>,
    %70 = vector.extract_strided_slice %28 {offsets = [128, 0], sizes = [64, 128], strides = [1, 1]} : vector<256x128xf32> to vector<64x128xf32>
    %71 = vector.extract_strided_slice %41 {offsets = [128, 0], sizes = [64, 128], strides = [1, 1]} : vector<256x128xf32> to vector<64x128xf32>
    %72 = tpu.concatenate %70, %71 in 0 : vector<64x128xf32>, vector<64x128xf32> -> vector<128x128xf32>
    %c2 = arith.constant 2 : index
    %c0_33 = arith.constant 0 : index
    %c0_34 = arith.constant 0 : index
    %73 = vector.load %arg4[%c2, %c0_33, %c0_34] : memref<4x128x256xf32, #tpu.memory_space<vmem>>, vector<1x128x256xf32>
    %74 = vector.shape_cast %73 : vector<1x128x256xf32> to vector<128x256xf32>
    %cst_35 = arith.constant dense<0.000000e+00> : vector<128x256xf32>
    %75 = tpu.matmul %72, %74, %cst_35 {dimension_numbers = #tpu.dot_dimension_numbers<[1], [0], [0], [1], [0, 0, 1, 1], [], []>} : vector<128x128xf32>, vector<128x256xf32>, vector<128x256xf32> -> vector<128x256xf32>
    %76 = vector.extract_strided_slice %75 {offsets = [0, 0], sizes = [64, 256], strides = [1, 1]} : vector<128x256xf32> to vector<64x256xf32>
    %c0_36 = arith.constant 0 : index
    %c132 = arith.constant 132 : index
    %c0_37 = arith.constant 0 : index
    %77 = vector.load %arg6[%c0_36, %c132, %c0_37] : memref<2x260x256xf32, #tpu.memory_space<vmem>>, vector<1x64x256xf32>
    %78 = vector.shape_cast %77 : vector<1x64x256xf32> to vector<64x256xf32>
    %79 = vector.shape_cast %76 : vector<64x256xf32> to vector<1x64x256xf32>
    tpu.vector_store %arg6[%c0_36, %c132, %c0_37], %79 {strides = array<i32>} : memref<2x260x256xf32, #tpu.memory_space<vmem>>, vector<1x64x256xf32>,
    %80 = vector.extract_strided_slice %75 {offsets = [64, 0], sizes = [64, 256], strides = [1, 1]} : vector<128x256xf32> to vector<64x256xf32>
    %c1_38 = arith.constant 1 : index
    %c132_39 = arith.constant 132 : index
    %c0_40 = arith.constant 0 : index
    %81 = vector.load %arg6[%c1_38, %c132_39, %c0_40] : memref<2x260x256xf32, #tpu.memory_space<vmem>>, vector<1x64x256xf32>
    %82 = vector.shape_cast %81 : vector<1x64x256xf32> to vector<64x256xf32>
    %83 = vector.shape_cast %80 : vector<64x256xf32> to vector<1x64x256xf32>
    tpu.vector_store %arg6[%c1_38, %c132_39, %c0_40], %83 {strides = array<i32>} : memref<2x260x256xf32, #tpu.memory_space<vmem>>, vector<1x64x256xf32>,
    %84 = vector.extract_strided_slice %28 {offsets = [192, 0], sizes = [64, 128], strides = [1, 1]} : vector<256x128xf32> to vector<64x128xf32>
    %85 = vector.extract_strided_slice %41 {offsets = [192, 0], sizes = [64, 128], strides = [1, 1]} : vector<256x128xf32> to vector<64x128xf32>
    %86 = tpu.concatenate %84, %85 in 0 : vector<64x128xf32>, vector<64x128xf32> -> vector<128x128xf32>
    %c3 = arith.constant 3 : index
    %c0_41 = arith.constant 0 : index
    %c0_42 = arith.constant 0 : index
    %87 = vector.load %arg4[%c3, %c0_41, %c0_42] : memref<4x128x256xf32, #tpu.memory_space<vmem>>, vector<1x128x256xf32>
    %88 = vector.shape_cast %87 : vector<1x128x256xf32> to vector<128x256xf32>
    %cst_43 = arith.constant dense<0.000000e+00> : vector<128x256xf32>
    %89 = tpu.matmul %86, %88, %cst_43 {dimension_numbers = #tpu.dot_dimension_numbers<[1], [0], [0], [1], [0, 0, 1, 1], [], []>} : vector<128x128xf32>, vector<128x256xf32>, vector<128x256xf32> -> vector<128x256xf32>
    %90 = vector.extract_strided_slice %89 {offsets = [0, 0], sizes = [64, 256], strides = [1, 1]} : vector<128x256xf32> to vector<64x256xf32>
    %c0_44 = arith.constant 0 : index
    %c196 = arith.constant 196 : index
    %c0_45 = arith.constant 0 : index
    %91 = vector.load %arg6[%c0_44, %c196, %c0_45] : memref<2x260x256xf32, #tpu.memory_space<vmem>>, vector<1x64x256xf32>
    %92 = vector.shape_cast %91 : vector<1x64x256xf32> to vector<64x256xf32>
    %93 = vector.shape_cast %90 : vector<64x256xf32> to vector<1x64x256xf32>
    tpu.vector_store %arg6[%c0_44, %c196, %c0_45], %93 {strides = array<i32>} : memref<2x260x256xf32, #tpu.memory_space<vmem>>, vector<1x64x256xf32>,
    %94 = vector.extract_strided_slice %89 {offsets = [64, 0], sizes = [64, 256], strides = [1, 1]} : vector<128x256xf32> to vector<64x256xf32>
    %c1_46 = arith.constant 1 : index
    %c196_47 = arith.constant 196 : index
    %c0_48 = arith.constant 0 : index
    %95 = vector.load %arg6[%c1_46, %c196_47, %c0_48] : memref<2x260x256xf32, #tpu.memory_space<vmem>>, vector<1x64x256xf32>
    %96 = vector.shape_cast %95 : vector<1x64x256xf32> to vector<64x256xf32>
    %97 = vector.shape_cast %94 : vector<64x256xf32> to vector<1x64x256xf32>
    tpu.vector_store %arg6[%c1_46, %c196_47, %c0_48], %97 {strides = array<i32>} : memref<2x260x256xf32, #tpu.memory_space<vmem>>, vector<1x64x256xf32>,
    return
  }
  func.func @transform_0(%arg0: i32) -> (i32, i32, i32) {
    %c0_i32 = arith.constant 0 : i32
    %c0_i32_0 = arith.constant 0 : i32
    %c0_i32_1 = arith.constant 0 : i32
    return %arg0, %c0_i32, %c0_i32_0 : i32, i32, i32
  }
  func.func @transform_1(%arg0: i32) -> (i32, i32) {
    %c0_i32 = arith.constant 0 : i32
    %c0_i32_0 = arith.constant 0 : i32
    %c0_i32_1 = arith.constant 0 : i32
    return %c0_i32, %c0_i32_0 : i32, i32
  }
  func.func @transform_2(%arg0: i32) -> (i32, i32) {
    %c0_i32 = arith.constant 0 : i32
    %c0_i32_0 = arith.constant 0 : i32
    %c0_i32_1 = arith.constant 0 : i32
    return %c0_i32, %c0_i32_0 : i32, i32
  }
  func.func @transform_3(%arg0: i32) -> (i32, i32, i32) {
    %c0_i32 = arith.constant 0 : i32
    %c0_i32_0 = arith.constant 0 : i32
    %c0_i32_1 = arith.constant 0 : i32
    %c0_i32_2 = arith.constant 0 : i32
    return %c0_i32, %c0_i32_0, %c0_i32_1 : i32, i32, i32
  }
  func.func @transform_4(%arg0: i32) -> (i32, i32) {
    %c0_i32 = arith.constant 0 : i32
    %c0_i32_0 = arith.constant 0 : i32
    %c0_i32_1 = arith.constant 0 : i32
    return %c0_i32, %c0_i32_0 : i32, i32
  }
  func.func @transform_5(%arg0: i32) -> (i32, i32, i32) {
    %c0_i32 = arith.constant 0 : i32
    %c0_i32_0 = arith.constant 0 : i32
    %c0_i32_1 = arith.constant 0 : i32
    return %arg0, %c0_i32, %c0_i32_0 : i32, i32, i32
  }
}

</mosaic_0001>

<llo_original>
// kernel: a_call__.1
$region0: #{a_call__.1}
  #allocation0 [shape = 'u32[]', space=smem, size = 0x4, offset = 0x4, fixed_abs, tag = 'smem constant byte address 0x4 - core index']
  #allocation1 [shape = 'u32[72,128]{1,0:T(1,128)}', space=vmem, size = 0x9000, scoped, tag = 'internal scratch']
  %s0 = inlined_call_operand.vmem [shape: f32[2,8,256], index: 0, kind: input, shape index: {}]
  %s1 = inlined_call_operand.hbm [shape: f32[256,1152], index: 1, kind: input, shape index: {}]
  %s2 = inlined_call_operand.hbm [shape: f32[256,72], index: 2, kind: input, shape index: {}]
  %s3 = inlined_call_operand.hbm [shape: f32[4,128,256], index: 3, kind: input, shape index: {}]
  %s4 = inlined_call_operand.hbm [shape: f32[256,1], index: 4, kind: input, shape index: {}]
  %s5 = inlined_call_operand.vmem [shape: f32[2,260,256], index: 5, kind: output, shape index: {}]
  %s6 = sld [smem:[#allocation0]]
  $region46: #{a_call__.1} parent=0
    _
  %s8 = ssub.s32 1, %s6
  %s9 = scalar_select 0, %s8, %s6
  $region1: #{a_call__.1} parent=0
    #allocation2 [shape = 'u8[1179648]{0}', space=vmem, size = 0x120000, scoped, tag = 'input window, operand 1, single buffered']
    #allocation3 [shape = 's32[1]{0}', space=sflag, size = 0x4, scoped, tag = 'scoped memory for a_call__.1']
    #allocation4 [shape = 'u8[131072]{0}', space=vmem, size = 0x20000, scoped, tag = 'input window, operand 2, single buffered']
    #allocation5 [shape = 's32[1]{0}', space=sflag, size = 0x4, scoped, tag = 'scoped memory for a_call__.1']
    #allocation6 [shape = 'u8[524288]{0}', space=vmem, size = 0x80000, scoped, tag = 'input window, operand 3, single buffered']
    #allocation7 [shape = 'u8[131072]{0}', space=vmem, size = 0x20000, scoped, tag = 'input window, operand 4, single buffered']
    #allocation8 [shape = 's32[1]{0}', space=sflag, size = 0x4, scoped, tag = 'scoped memory for a_call__.1']
    %10 = vsyncpa [#allocation3], 0
    %11 = vsyncpa [#allocation5], 0
    %12 = vsyncpa [#allocation8], 0
    // Predicated region
    $region2: #{a_call__.1} parent=1 // pred_check
      _
    $region3: #{a_call__.1} parent=1 // pred_check_branch
      %14 = sbr.rel (0) target = $region5
    $region4: #{a_call__.1} parent=1 // pred_region
      _
    $region5: #{a_call__.1} parent=1 // pred_fallthru
      _
    // Predicated region
    $region6: #{a_call__.1} parent=1 // pred_check
      _
    $region7: #{a_call__.1} parent=1 // pred_check_branch
      %16 = sbr.rel (0) target = $region9
    $region8: #{a_call__.1} parent=1 // pred_region
      %18 = vsyncadd [#allocation3], 0
      %s19 = sshll.u32 %s1, 4
      %s20 = int_to_ptr.hbm [resolvable:$true] %s19
      %s21 = sshll.u32 [#allocation2], 4
      %s22 = int_to_ptr.vmem [resolvable:$true] %s21
      %27 = dma.hbm_to_vmem [thread:$0]  %s20, 36864, %s22, [#allocation3], 1152, 1152, 72
    $region9: #{a_call__.1} parent=1 // pred_fallthru
      _
    // Predicated region
    $region10: #{a_call__.1} parent=1 // pred_check
      _
    $region11: #{a_call__.1} parent=1 // pred_check_branch
      %29 = sbr.rel (0) target = $region13
    $region12: #{a_call__.1} parent=1 // pred_region
      %31 = vsyncadd [#allocation5], 0
      %s32 = sshll.u32 %s2, 4
      %s33 = int_to_ptr.hbm [resolvable:$true] %s32
      %s34 = sshll.u32 [#allocation4], 4
      %s35 = int_to_ptr.vmem [resolvable:$true] %s34
      %40 = dma.hbm_to_vmem [thread:$0]  %s33, 4096, %s35, [#allocation5], 128, 128, 8
    $region13: #{a_call__.1} parent=1 // pred_fallthru
      _
    // Predicated region
    $region14: #{a_call__.1} parent=1 // pred_check
      _
    $region15: #{a_call__.1} parent=1 // pred_check_branch
      %42 = sbr.rel (0) target = $region17
    $region16: #{a_call__.1} parent=1 // pred_region
      %44 = vsyncadd [#allocation5], 0
      %s45 = sshll.u32 %s3, 4
      %s46 = int_to_ptr.hbm [resolvable:$true] %s45
      %s47 = sshll.u32 [#allocation6], 4
      %s48 = int_to_ptr.vmem [resolvable:$true] %s47
      %53 = dma.hbm_to_vmem [thread:$0]  %s46, 16384, %s48, [#allocation5], 256, 256, 16
    $region17: #{a_call__.1} parent=1 // pred_fallthru
      _
    // Predicated region
    $region18: #{a_call__.1} parent=1 // pred_check
      _
    $region19: #{a_call__.1} parent=1 // pred_check_branch
      %55 = sbr.rel (0) target = $region21
    $region20: #{a_call__.1} parent=1 // pred_region
      %57 = vsyncadd [#allocation8], 0
      %s58 = sshll.u32 %s4, 4
      %s59 = int_to_ptr.hbm [resolvable:$true] %s58
      %s60 = sshll.u32 [#allocation7], 4
      %s61 = int_to_ptr.vmem [resolvable:$true] %s60
      %66 = dma.hbm_to_vmem [thread:$0]  %s59, 4096, %s61, [#allocation8], 128, 128, 8
    $region21: #{a_call__.1} parent=1 // pred_fallthru
      _
    // Predicated region
    $region22: #{a_call__.1} parent=1 // pred_check
      _
    $region23: #{a_call__.1} parent=1 // pred_check_branch
      %68 = sbr.rel (0) target = $region25
    $region24: #{a_call__.1} parent=1 // pred_region
      %70 = dma.done [#allocation3], 36864
    $region25: #{a_call__.1} parent=1 // pred_fallthru
      _
    // Predicated region
    $region26: #{a_call__.1} parent=1 // pred_check
      _
    $region27: #{a_call__.1} parent=1 // pred_check_branch
      %72 = sbr.rel (0) target = $region29
    $region28: #{a_call__.1} parent=1 // pred_region
      %74 = dma.done [#allocation5], 4096
    $region29: #{a_call__.1} parent=1 // pred_fallthru
      _
    // Predicated region
    $region30: #{a_call__.1} parent=1 // pred_check
      _
    $region31: #{a_call__.1} parent=1 // pred_check_branch
      %76 = sbr.rel (0) target = $region33
    $region32: #{a_call__.1} parent=1 // pred_region
      %78 = dma.done [#allocation5], 16384
    $region33: #{a_call__.1} parent=1 // pred_fallthru
      _
    // Predicated region
    $region34: #{a_call__.1} parent=1 // pred_check
      _
    $region35: #{a_call__.1} parent=1 // pred_check_branch
      %80 = sbr.rel (0) target = $region37
    $region36: #{a_call__.1} parent=1 // pred_region
      %82 = dma.done [#allocation8], 4096
    $region37: #{a_call__.1} parent=1 // pred_fallthru
      _
    %v83 = vld [vmem:[%s0] sm:$0xff]
    %v84 = vld [vmem:[%s0 + $0x8] sm:$0xff]
    %v85 = vld [vmem:[%s0 + $0x10] sm:$0xff]
    %v86 = vld [vmem:[%s0 + $0x18] sm:$0xff]
    %87 = vst [vmem:[%s5] sm:$0xf] %v83
    %88 = vst [vmem:[%s5 + $0x8] sm:$0xf] %v84
    %s89 = scalar_lea.vmem %s5, 528
    %90 = vst [vmem:[%s89] sm:$0xf] %v85
    %91 = vst [vmem:[%s89 + $0x8] sm:$0xf] %v86
    %v92 = vld [vmem:[#allocation2] sm:$0xff]
    %v93 = vld [vmem:[#allocation2 + $0x8] sm:$0xff]
    %v94 = vld [vmem:[#allocation2 + $0x10] sm:$0xff]
    %v95 = vld [vmem:[#allocation2 + $0x18] sm:$0xff]
    %v96 = vld [vmem:[#allocation2 + $0x20] sm:$0xff]
    %v97 = vld [vmem:[#allocation2 + $0x28] sm:$0xff]
    %v98 = vld [vmem:[#allocation2 + $0x30] sm:$0xff]
    %v99 = vld [vmem:[#allocation2 + $0x38] sm:$0xff]
    %v100 = vld [vmem:[#allocation2 + $0x40] sm:$0xff]
    %v101 = vld [vmem:[#allocation2 + $0x48] sm:$0xff]
    %v102 = vld [vmem:[#allocation2 + $0x50] sm:$0xff]
    %v103 = vld [vmem:[#allocation2 + $0x58] sm:$0xff]
    %v104 = vld [vmem:[#allocation2 + $0x60] sm:$0xff]
    %v105 = vld [vmem:[#allocation2 + $0x68] sm:$0xff]
    %v106 = vld [vmem:[#allocation2 + $0x70] sm:$0xff]
    %v107 = vld [vmem:[#allocation2 + $0x78] sm:$0xff]
    %v108 = vld [vmem:[#allocation2 + $0x80] sm:$0xff]
    %v109 = vld [vmem:[#allocation2 + $0x88] sm:$0xff]
    %v110 = vld [vmem:[#allocation2 + $0x90] sm:$0xff]
    %v111 = vld [vmem:[#allocation2 + $0x98] sm:$0xff]
    %v112 = vld [vmem:[#allocation2 + $0xa0] sm:$0xff]
    %v113 = vld [vmem:[#allocation2 + $0xa8] sm:$0xff]
    %v114 = vld [vmem:[#allocation2 + $0xb0] sm:$0xff]
    %v115 = vld [vmem:[#allocation2 + $0xb8] sm:$0xff]
    %v116 = vld [vmem:[#allocation2 + $0xc0] sm:$0xff]
    %v117 = vld [vmem:[#allocation2 + $0xc8] sm:$0xff]
    %v118 = vld [vmem:[#allocation2 + $0xd0] sm:$0xff]
    %v119 = vld [vmem:[#allocation2 + $0xd8] sm:$0xff]
    %v120 = vld [vmem:[#allocation2 + $0xe0] sm:$0xff]
    %v121 = vld [vmem:[#allocation2 + $0xe8] sm:$0xff]
    %v122 = vld [vmem:[#allocation2 + $0xf0] sm:$0xff]
    %v123 = vld [vmem:[#allocation2 + $0xf8] sm:$0xff]
    %v124 = vld [vmem:[#allocation2 + $0x100] sm:$0xff]
    %v125 = vld [vmem:[#allocation2 + $0x108] sm:$0xff]
    %v126 = vld [vmem:[#allocation2 + $0x110] sm:$0xff]
    %v127 = vld [vmem:[#allocation2 + $0x118] sm:$0xff]
    %v128 = vld [vmem:[#allocation2 + $0x120] sm:$0xff]
    %v129 = vld [vmem:[#allocation2 + $0x128] sm:$0xff]
    %v130 = vld [vmem:[#allocation2 + $0x130] sm:$0xff]
    %v131 = vld [vmem:[#allocation2 + $0x138] sm:$0xff]
    %v132 = vld [vmem:[#allocation2 + $0x140] sm:$0xff]
    %v133 = vld [vmem:[#allocation2 + $0x148] sm:$0xff]
    %v134 = vld [vmem:[#allocation2 + $0x150] sm:$0xff]
    %v135 = vld [vmem:[#allocation2 + $0x158] sm:$0xff]
    %v136 = vld [vmem:[#allocation2 + $0x160] sm:$0xff]
    %v137 = vld [vmem:[#allocation2 + $0x168] sm:$0xff]
    %v138 = vld [vmem:[#allocation2 + $0x170] sm:$0xff]
    %v139 = vld [vmem:[#allocation2 + $0x178] sm:$0xff]
    %v140 = vld [vmem:[#allocation2 + $0x180] sm:$0xff]
    %v141 = vld [vmem:[#allocation2 + $0x188] sm:$0xff]
    %v142 = vld [vmem:[#allocation2 + $0x190] sm:$0xff]
    %v143 = vld [vmem:[#allocation2 + $0x198] sm:$0xff]
    %v144 = vld [vmem:[#allocation2 + $0x1a0] sm:$0xff]
    %v145 = vld [vmem:[#allocation2 + $0x1a8] sm:$0xff]
    %v146 = vld [vmem:[#allocation2 + $0x1b0] sm:$0xff]
    %v147 = vld [vmem:[#allocation2 + $0x1b8] sm:$0xff]
    %v148 = vld [vmem:[#allocation2 + $0x1c0] sm:$0xff]
    %v149 = vld [vmem:[#allocation2 + $0x1c8] sm:$0xff]
    %v150 = vld [vmem:[#allocation2 + $0x1d0] sm:$0xff]
    %v151 = vld [vmem:[#allocation2 + $0x1d8] sm:$0xff]
    %v152 = vld [vmem:[#allocation2 + $0x1e0] sm:$0xff]
    %v153 = vld [vmem:[#allocation2 + $0x1e8] sm:$0xff]
    %v154 = vld [vmem:[#allocation2 + $0x1f0] sm:$0xff]
    %v155 = vld [vmem:[#allocation2 + $0x1f8] sm:$0xff]
    %v156 = vld [vmem:[#allocation2 + $0x200] sm:$0xff]
    %v157 = vld [vmem:[#allocation2 + $0x208] sm:$0xff]
    %v158 = vld [vmem:[#allocation2 + $0x210] sm:$0xff]
    %v159 = vld [vmem:[#allocation2 + $0x218] sm:$0xff]
    %v160 = vld [vmem:[#allocation2 + $0x220] sm:$0xff]
    %v161 = vld [vmem:[#allocation2 + $0x228] sm:$0xff]
    %v162 = vld [vmem:[#allocation2 + $0x230] sm:$0xff]
    %v163 = vld [vmem:[#allocation2 + $0x238] sm:$0xff]
    %v164 = vld [vmem:[#allocation2 + $0x240] sm:$0xff]
    %v165 = vld [vmem:[#allocation2 + $0x248] sm:$0xff]
    %v166 = vld [vmem:[#allocation2 + $0x250] sm:$0xff]
    %v167 = vld [vmem:[#allocation2 + $0x258] sm:$0xff]
    %v168 = vld [vmem:[#allocation2 + $0x260] sm:$0xff]
    %v169 = vld [vmem:[#allocation2 + $0x268] sm:$0xff]
    %v170 = vld [vmem:[#allocation2 + $0x270] sm:$0xff]
    %v171 = vld [vmem:[#allocation2 + $0x278] sm:$0xff]
    %v172 = vld [vmem:[#allocation2 + $0x280] sm:$0xff]
    %v173 = vld [vmem:[#allocation2 + $0x288] sm:$0xff]
    %v174 = vld [vmem:[#allocation2 + $0x290] sm:$0xff]
    %v175 = vld [vmem:[#allocation2 + $0x298] sm:$0xff]
    %v176 = vld [vmem:[#allocation2 + $0x2a0] sm:$0xff]
    %v177 = vld [vmem:[#allocation2 + $0x2a8] sm:$0xff]
    %v178 = vld [vmem:[#allocation2 + $0x2b0] sm:$0xff]
    %v179 = vld [vmem:[#allocation2 + $0x2b8] sm:$0xff]
    %v180 = vld [vmem:[#allocation2 + $0x2c0] sm:$0xff]
    %v181 = vld [vmem:[#allocation2 + $0x2c8] sm:$0xff]
    %v182 = vld [vmem:[#allocation2 + $0x2d0] sm:$0xff]
    %v183 = vld [vmem:[#allocation2 + $0x2d8] sm:$0xff]
    %v184 = vld [vmem:[#allocation2 + $0x2e0] sm:$0xff]
    %v185 = vld [vmem:[#allocation2 + $0x2e8] sm:$0xff]
    %v186 = vld [vmem:[#allocation2 + $0x2f0] sm:$0xff]
    %v187 = vld [vmem:[#allocation2 + $0x2f8] sm:$0xff]
    %v188 = vld [vmem:[#allocation2 + $0x300] sm:$0xff]
    %v189 = vld [vmem:[#allocation2 + $0x308] sm:$0xff]
    %v190 = vld [vmem:[#allocation2 + $0x310] sm:$0xff]
    %v191 = vld [vmem:[#allocation2 + $0x318] sm:$0xff]
    %v192 = vld [vmem:[#allocation2 + $0x320] sm:$0xff]
    %v193 = vld [vmem:[#allocation2 + $0x328] sm:$0xff]
    %v194 = vld [vmem:[#allocation2 + $0x330] sm:$0xff]
    %v195 = vld [vmem:[#allocation2 + $0x338] sm:$0xff]
    %v196 = vld [vmem:[#allocation2 + $0x340] sm:$0xff]
    %v197 = vld [vmem:[#allocation2 + $0x348] sm:$0xff]
    %v198 = vld [vmem:[#allocation2 + $0x350] sm:$0xff]
    %v199 = vld [vmem:[#allocation2 + $0x358] sm:$0xff]
    %v200 = vld [vmem:[#allocation2 + $0x360] sm:$0xff]
    %v201 = vld [vmem:[#allocation2 + $0x368] sm:$0xff]
    %v202 = vld [vmem:[#allocation2 + $0x370] sm:$0xff]
    %v203 = vld [vmem:[#allocation2 + $0x378] sm:$0xff]
    %v204 = vld [vmem:[#allocation2 + $0x380] sm:$0xff]
    %v205 = vld [vmem:[#allocation2 + $0x388] sm:$0xff]
    %v206 = vld [vmem:[#allocation2 + $0x390] sm:$0xff]
    %v207 = vld [vmem:[#allocation2 + $0x398] sm:$0xff]
    %v208 = vld [vmem:[#allocation2 + $0x3a0] sm:$0xff]
    %v209 = vld [vmem:[#allocation2 + $0x3a8] sm:$0xff]
    %v210 = vld [vmem:[#allocation2 + $0x3b0] sm:$0xff]
    %v211 = vld [vmem:[#allocation2 + $0x3b8] sm:$0xff]
    %v212 = vld [vmem:[#allocation2 + $0x3c0] sm:$0xff]
    %v213 = vld [vmem:[#allocation2 + $0x3c8] sm:$0xff]
    %v214 = vld [vmem:[#allocation2 + $0x3d0] sm:$0xff]
    %v215 = vld [vmem:[#allocation2 + $0x3d8] sm:$0xff]
    %v216 = vld [vmem:[#allocation2 + $0x3e0] sm:$0xff]
    %v217 = vld [vmem:[#allocation2 + $0x3e8] sm:$0xff]
    %v218 = vld [vmem:[#allocation2 + $0x3f0] sm:$0xff]
    %v219 = vld [vmem:[#allocation2 + $0x3f8] sm:$0xff]
    %v220 = vld [vmem:[#allocation2 + $0x400] sm:$0xff]
    %v221 = vld [vmem:[#allocation2 + $0x408] sm:$0xff]
    %v222 = vld [vmem:[#allocation2 + $0x410] sm:$0xff]
    %v223 = vld [vmem:[#allocation2 + $0x418] sm:$0xff]
    %v224 = vld [vmem:[#allocation2 + $0x420] sm:$0xff]
    %v225 = vld [vmem:[#allocation2 + $0x428] sm:$0xff]
    %v226 = vld [vmem:[#allocation2 + $0x430] sm:$0xff]
    %v227 = vld [vmem:[#allocation2 + $0x438] sm:$0xff]
    %v228 = vld [vmem:[#allocation2 + $0x440] sm:$0xff]
    %v229 = vld [vmem:[#allocation2 + $0x448] sm:$0xff]
    %v230 = vld [vmem:[#allocation2 + $0x450] sm:$0xff]
    %v231 = vld [vmem:[#allocation2 + $0x458] sm:$0xff]
    %v232 = vld [vmem:[#allocation2 + $0x460] sm:$0xff]
    %v233 = vld [vmem:[#allocation2 + $0x468] sm:$0xff]
    %v234 = vld [vmem:[#allocation2 + $0x470] sm:$0xff]
    %v235 = vld [vmem:[#allocation2 + $0x478] sm:$0xff]
    %v236 = vld [vmem:[#allocation2 + $0x480] sm:$0xff]
    %v237 = vld [vmem:[#allocation2 + $0x488] sm:$0xff]
    %v238 = vld [vmem:[#allocation2 + $0x490] sm:$0xff]
    %v239 = vld [vmem:[#allocation2 + $0x498] sm:$0xff]
    %v240 = vld [vmem:[#allocation2 + $0x4a0] sm:$0xff]
    %v241 = vld [vmem:[#allocation2 + $0x4a8] sm:$0xff]
    %v242 = vld [vmem:[#allocation2 + $0x4b0] sm:$0xff]
    %v243 = vld [vmem:[#allocation2 + $0x4b8] sm:$0xff]
    %v244 = vld [vmem:[#allocation2 + $0x4c0] sm:$0xff]
    %v245 = vld [vmem:[#allocation2 + $0x4c8] sm:$0xff]
    %v246 = vld [vmem:[#allocation2 + $0x4d0] sm:$0xff]
    %v247 = vld [vmem:[#allocation2 + $0x4d8] sm:$0xff]
    %v248 = vld [vmem:[#allocation2 + $0x4e0] sm:$0xff]
    %v249 = vld [vmem:[#allocation2 + $0x4e8] sm:$0xff]
    %v250 = vld [vmem:[#allocation2 + $0x4f0] sm:$0xff]
    %v251 = vld [vmem:[#allocation2 + $0x4f8] sm:$0xff]
    %v252 = vld [vmem:[#allocation2 + $0x500] sm:$0xff]
    %v253 = vld [vmem:[#allocation2 + $0x508] sm:$0xff]
    %v254 = vld [vmem:[#allocation2 + $0x510] sm:$0xff]
    %v255 = vld [vmem:[#allocation2 + $0x518] sm:$0xff]
    %v256 = vld [vmem:[#allocation2 + $0x520] sm:$0xff]
    %v257 = vld [vmem:[#allocation2 + $0x528] sm:$0xff]
    %v258 = vld [vmem:[#allocation2 + $0x530] sm:$0xff]
    %v259 = vld [vmem:[#allocation2 + $0x538] sm:$0xff]
    %v260 = vld [vmem:[#allocation2 + $0x540] sm:$0xff]
    %v261 = vld [vmem:[#allocation2 + $0x548] sm:$0xff]
    %v262 = vld [vmem:[#allocation2 + $0x550] sm:$0xff]
    %v263 = vld [vmem:[#allocation2 + $0x558] sm:$0xff]
    %v264 = vld [vmem:[#allocation2 + $0x560] sm:$0xff]
    %v265 = vld [vmem:[#allocation2 + $0x568] sm:$0xff]
    %v266 = vld [vmem:[#allocation2 + $0x570] sm:$0xff]
    %v267 = vld [vmem:[#allocation2 + $0x578] sm:$0xff]
    %v268 = vld [vmem:[#allocation2 + $0x580] sm:$0xff]
    %v269 = vld [vmem:[#allocation2 + $0x588] sm:$0xff]
    %v270 = vld [vmem:[#allocation2 + $0x590] sm:$0xff]
    %v271 = vld [vmem:[#allocation2 + $0x598] sm:$0xff]
    %v272 = vld [vmem:[#allocation2 + $0x5a0] sm:$0xff]
    %v273 = vld [vmem:[#allocation2 + $0x5a8] sm:$0xff]
    %v274 = vld [vmem:[#allocation2 + $0x5b0] sm:$0xff]
    %v275 = vld [vmem:[#allocation2 + $0x5b8] sm:$0xff]
    %v276 = vld [vmem:[#allocation2 + $0x5c0] sm:$0xff]
    %v277 = vld [vmem:[#allocation2 + $0x5c8] sm:$0xff]
    %v278 = vld [vmem:[#allocation2 + $0x5d0] sm:$0xff]
    %v279 = vld [vmem:[#allocation2 + $0x5d8] sm:$0xff]
    %v280 = vld [vmem:[#allocation2 + $0x5e0] sm:$0xff]
    %v281 = vld [vmem:[#allocation2 + $0x5e8] sm:$0xff]
    %v282 = vld [vmem:[#allocation2 + $0x5f0] sm:$0xff]
    %v283 = vld [vmem:[#allocation2 + $0x5f8] sm:$0xff]
    %v284 = vld [vmem:[#allocation2 + $0x600] sm:$0xff]
    %v285 = vld [vmem:[#allocation2 + $0x608] sm:$0xff]
    %v286 = vld [vmem:[#allocation2 + $0x610] sm:$0xff]
    %v287 = vld [vmem:[#allocation2 + $0x618] sm:$0xff]
    %v288 = vld [vmem:[#allocation2 + $0x620] sm:$0xff]
    %v289 = vld [vmem:[#allocation2 + $0x628] sm:$0xff]
    %v290 = vld [vmem:[#allocation2 + $0x630] sm:$0xff]
    %v291 = vld [vmem:[#allocation2 + $0x638] sm:$0xff]
    %v292 = vld [vmem:[#allocation2 + $0x640] sm:$0xff]
    %v293 = vld [vmem:[#allocation2 + $0x648] sm:$0xff]
    %v294 = vld [vmem:[#allocation2 + $0x650] sm:$0xff]
    %v295 = vld [vmem:[#allocation2 + $0x658] sm:$0xff]
    %v296 = vld [vmem:[#allocation2 + $0x660] sm:$0xff]
    %v297 = vld [vmem:[#allocation2 + $0x668] sm:$0xff]
    %v298 = vld [vmem:[#allocation2 + $0x670] sm:$0xff]
    %v299 = vld [vmem:[#allocation2 + $0x678] sm:$0xff]
    %v300 = vld [vmem:[#allocation2 + $0x680] sm:$0xff]
    %v301 = vld [vmem:[#allocation2 + $0x688] sm:$0xff]
    %v302 = vld [vmem:[#allocation2 + $0x690] sm:$0xff]
    %v303 = vld [vmem:[#allocation2 + $0x698] sm:$0xff]
    %v304 = vld [vmem:[#allocation2 + $0x6a0] sm:$0xff]
    %v305 = vld [vmem:[#allocation2 + $0x6a8] sm:$0xff]
    %v306 = vld [vmem:[#allocation2 + $0x6b0] sm:$0xff]
    %v307 = vld [vmem:[#allocation2 + $0x6b8] sm:$0xff]
    %v308 = vld [vmem:[#allocation2 + $0x6c0] sm:$0xff]
    %v309 = vld [vmem:[#allocation2 + $0x6c8] sm:$0xff]
    %v310 = vld [vmem:[#allocation2 + $0x6d0] sm:$0xff]
    %v311 = vld [vmem:[#allocation2 + $0x6d8] sm:$0xff]
    %v312 = vld [vmem:[#allocation2 + $0x6e0] sm:$0xff]
    %v313 = vld [vmem:[#allocation2 + $0x6e8] sm:$0xff]
    %v314 = vld [vmem:[#allocation2 + $0x6f0] sm:$0xff]
    %v315 = vld [vmem:[#allocation2 + $0x6f8] sm:$0xff]
    %v316 = vld [vmem:[#allocation2 + $0x700] sm:$0xff]
    %v317 = vld [vmem:[#allocation2 + $0x708] sm:$0xff]
    %v318 = vld [vmem:[#allocation2 + $0x710] sm:$0xff]
    %v319 = vld [vmem:[#allocation2 + $0x718] sm:$0xff]
    %v320 = vld [vmem:[#allocation2 + $0x720] sm:$0xff]
    %v321 = vld [vmem:[#allocation2 + $0x728] sm:$0xff]
    %v322 = vld [vmem:[#allocation2 + $0x730] sm:$0xff]
    %v323 = vld [vmem:[#allocation2 + $0x738] sm:$0xff]
    %v324 = vld [vmem:[#allocation2 + $0x740] sm:$0xff]
    %v325 = vld [vmem:[#allocation2 + $0x748] sm:$0xff]
    %v326 = vld [vmem:[#allocation2 + $0x750] sm:$0xff]
    %v327 = vld [vmem:[#allocation2 + $0x758] sm:$0xff]
    %v328 = vld [vmem:[#allocation2 + $0x760] sm:$0xff]
    %v329 = vld [vmem:[#allocation2 + $0x768] sm:$0xff]
    %v330 = vld [vmem:[#allocation2 + $0x770] sm:$0xff]
    %v331 = vld [vmem:[#allocation2 + $0x778] sm:$0xff]
    %v332 = vld [vmem:[#allocation2 + $0x780] sm:$0xff]
    %v333 = vld [vmem:[#allocation2 + $0x788] sm:$0xff]
    %v334 = vld [vmem:[#allocation2 + $0x790] sm:$0xff]
    %v335 = vld [vmem:[#allocation2 + $0x798] sm:$0xff]
    %v336 = vld [vmem:[#allocation2 + $0x7a0] sm:$0xff]
    %v337 = vld [vmem:[#allocation2 + $0x7a8] sm:$0xff]
    %v338 = vld [vmem:[#allocation2 + $0x7b0] sm:$0xff]
    %v339 = vld [vmem:[#allocation2 + $0x7b8] sm:$0xff]
    %v340 = vld [vmem:[#allocation2 + $0x7c0] sm:$0xff]
    %v341 = vld [vmem:[#allocation2 + $0x7c8] sm:$0xff]
    %v342 = vld [vmem:[#allocation2 + $0x7d0] sm:$0xff]
    %v343 = vld [vmem:[#allocation2 + $0x7d8] sm:$0xff]
    %v344 = vld [vmem:[#allocation2 + $0x7e0] sm:$0xff]
    %v345 = vld [vmem:[#allocation2 + $0x7e8] sm:$0xff]
    %v346 = vld [vmem:[#allocation2 + $0x7f0] sm:$0xff]
    %v347 = vld [vmem:[#allocation2 + $0x7f8] sm:$0xff]
    %v348 = vld [vmem:[#allocation2 + $0x800] sm:$0xff]
    %v349 = vld [vmem:[#allocation2 + $0x808] sm:$0xff]
    %v350 = vld [vmem:[#allocation2 + $0x810] sm:$0xff]
    %v351 = vld [vmem:[#allocation2 + $0x818] sm:$0xff]
    %v352 = vld [vmem:[#allocation2 + $0x820] sm:$0xff]
    %v353 = vld [vmem:[#allocation2 + $0x828] sm:$0xff]
    %v354 = vld [vmem:[#allocation2 + $0x830] sm:$0xff]
    %v355 = vld [vmem:[#allocation2 + $0x838] sm:$0xff]
    %v356 = vld [vmem:[#allocation2 + $0x840] sm:$0xff]
    %v357 = vld [vmem:[#allocation2 + $0x848] sm:$0xff]
    %v358 = vld [vmem:[#allocation2 + $0x850] sm:$0xff]
    %v359 = vld [vmem:[#allocation2 + $0x858] sm:$0xff]
    %v360 = vld [vmem:[#allocation2 + $0x860] sm:$0xff]
    %v361 = vld [vmem:[#allocation2 + $0x868] sm:$0xff]
    %v362 = vld [vmem:[#allocation2 + $0x870] sm:$0xff]
    %v363 = vld [vmem:[#allocation2 + $0x878] sm:$0xff]
    %v364 = vld [vmem:[#allocation2 + $0x880] sm:$0xff]
    %v365 = vld [vmem:[#allocation2 + $0x888] sm:$0xff]
    %v366 = vld [vmem:[#allocation2 + $0x890] sm:$0xff]
    %v367 = vld [vmem:[#allocation2 + $0x898] sm:$0xff]
    %v368 = vld [vmem:[#allocation2 + $0x8a0] sm:$0xff]
    %v369 = vld [vmem:[#allocation2 + $0x8a8] sm:$0xff]
    %v370 = vld [vmem:[#allocation2 + $0x8b0] sm:$0xff]
    %v371 = vld [vmem:[#allocation2 + $0x8b8] sm:$0xff]
    %v372 = vld [vmem:[#allocation2 + $0x8c0] sm:$0xff]
    %v373 = vld [vmem:[#allocation2 + $0x8c8] sm:$0xff]
    %v374 = vld [vmem:[#allocation2 + $0x8d0] sm:$0xff]
    %v375 = vld [vmem:[#allocation2 + $0x8d8] sm:$0xff]
    %v376 = vld [vmem:[#allocation2 + $0x8e0] sm:$0xff]
    %v377 = vld [vmem:[#allocation2 + $0x8e8] sm:$0xff]
    %v378 = vld [vmem:[#allocation2 + $0x8f0] sm:$0xff]
    %v379 = vld [vmem:[#allocation2 + $0x8f8] sm:$0xff]
    %380 = vmatpush.msra.mxu0 %v227
    %381 = vmatpush.msra.mxu0 %v218
    %382 = vmatpush.msra.mxu0 %v209
    %383 = vmatpush.msra.mxu0 %v200
    %384 = vmatpush.msra.mxu0 %v191
    %385 = vmatpush.msra.mxu0 %v182
    %386 = vmatpush.msra.mxu0 %v173
    %387 = vmatpush.msra.mxu0 %v164
    %388 = vmatpush.msra.mxu0 %v155
    %389 = vmatpush.msra.mxu0 %v146
    %390 = vmatpush.msra.mxu0 %v137
    %391 = vmatpush.msra.mxu0 %v128
    %392 = vmatpush.msra.mxu0 %v119
    %393 = vmatpush.msra.mxu0 %v110
    %394 = vmatpush.msra.mxu0 %v101
    %395 = vmatpush.msra.mxu0 %v92
    %396 = vmatmul.f32.gmra.mxu0 %v83
    %v397 = vpop.f32.mrf.mxu0
    %v398 = vadd.f32 0.0, %v397
    %399 = vmatmul.f32.gmra.mxu0 %v85
    %v400 = vpop.f32.mrf.mxu0
    %v401 = vadd.f32 0.0, %v400
    %402 = vdwg.mxu0
    %403 = vmatpush.msra.mxu0 %v371
    %404 = vmatpush.msra.mxu0 %v362
    %405 = vmatpush.msra.mxu0 %v353
    %406 = vmatpush.msra.mxu0 %v344
    %407 = vmatpush.msra.mxu0 %v335
    %408 = vmatpush.msra.mxu0 %v326
    %409 = vmatpush.msra.mxu0 %v317
    %410 = vmatpush.msra.mxu0 %v308
    %411 = vmatpush.msra.mxu0 %v299
    %412 = vmatpush.msra.mxu0 %v290
    %413 = vmatpush.msra.mxu0 %v281
    %414 = vmatpush.msra.mxu0 %v272
    %415 = vmatpush.msra.mxu0 %v263
    %416 = vmatpush.msra.mxu0 %v254
    %417 = vmatpush.msra.mxu0 %v245
    %418 = vmatpush.msra.mxu0 %v236
    %419 = vmatmul.f32.gmra.mxu0 %v84
    %v420 = vpop.f32.mrf.mxu0
    %v421 = vadd.f32 %v398, %v420
    %422 = vmatmul.f32.gmra.mxu0 %v86
    %v423 = vpop.f32.mrf.mxu0
    %v424 = vadd.f32 %v401, %v423
    %425 = vdwg.mxu0
    %426 = vmatpush.msra.mxu0 %v228
    %427 = vmatpush.msra.mxu0 %v219
    %428 = vmatpush.msra.mxu0 %v210
    %429 = vmatpush.msra.mxu0 %v201
    %430 = vmatpush.msra.mxu0 %v192
    %431 = vmatpush.msra.mxu0 %v183
    %432 = vmatpush.msra.mxu0 %v174
    %433 = vmatpush.msra.mxu0 %v165
    %434 = vmatpush.msra.mxu0 %v156
    %435 = vmatpush.msra.mxu0 %v147
    %436 = vmatpush.msra.mxu0 %v138
    %437 = vmatpush.msra.mxu0 %v129
    %438 = vmatpush.msra.mxu0 %v120
    %439 = vmatpush.msra.mxu0 %v111
    %440 = vmatpush.msra.mxu0 %v102
    %441 = vmatpush.msra.mxu0 %v93
    %442 = vmatmul.f32.gmra.mxu0 %v83
    %v443 = vpop.f32.mrf.mxu0
    %v444 = vadd.f32 0.0, %v443
    %445 = vmatmul.f32.gmra.mxu0 %v85
    %v446 = vpop.f32.mrf.mxu0
    %v447 = vadd.f32 0.0, %v446
    %448 = vdwg.mxu0
    %449 = vmatpush.msra.mxu0 %v372
    %450 = vmatpush.msra.mxu0 %v363
    %451 = vmatpush.msra.mxu0 %v354
    %452 = vmatpush.msra.mxu0 %v345
    %453 = vmatpush.msra.mxu0 %v336
    %454 = vmatpush.msra.mxu0 %v327
    %455 = vmatpush.msra.mxu0 %v318
    %456 = vmatpush.msra.mxu0 %v309
    %457 = vmatpush.msra.mxu0 %v300
    %458 = vmatpush.msra.mxu0 %v291
    %459 = vmatpush.msra.mxu0 %v282
    %460 = vmatpush.msra.mxu0 %v273
    %461 = vmatpush.msra.mxu0 %v264
    %462 = vmatpush.msra.mxu0 %v255
    %463 = vmatpush.msra.mxu0 %v246
    %464 = vmatpush.msra.mxu0 %v237
    %465 = vmatmul.f32.gmra.mxu0 %v84
    %v466 = vpop.f32.mrf.mxu0
    %v467 = vadd.f32 %v444, %v466
    %468 = vmatmul.f32.gmra.mxu0 %v86
    %v469 = vpop.f32.mrf.mxu0
    %v470 = vadd.f32 %v447, %v469
    %471 = vdwg.mxu0
    %472 = vmatpush.msra.mxu0 %v229
    %473 = vmatpush.msra.mxu0 %v220
    %474 = vmatpush.msra.mxu0 %v211
    %475 = vmatpush.msra.mxu0 %v202
    %476 = vmatpush.msra.mxu0 %v193
    %477 = vmatpush.msra.mxu0 %v184
    %478 = vmatpush.msra.mxu0 %v175
    %479 = vmatpush.msra.mxu0 %v166
    %480 = vmatpush.msra.mxu0 %v157
    %481 = vmatpush.msra.mxu0 %v148
    %482 = vmatpush.msra.mxu0 %v139
    %483 = vmatpush.msra.mxu0 %v130
    %484 = vmatpush.msra.mxu0 %v121
    %485 = vmatpush.msra.mxu0 %v112
    %486 = vmatpush.msra.mxu0 %v103
    %487 = vmatpush.msra.mxu0 %v94
    %488 = vmatmul.f32.gmra.mxu0 %v83
    %v489 = vpop.f32.mrf.mxu0
    %v490 = vadd.f32 0.0, %v489
    %491 = vmatmul.f32.gmra.mxu0 %v85
    %v492 = vpop.f32.mrf.mxu0
    %v493 = vadd.f32 0.0, %v492
    %494 = vdwg.mxu0
    %495 = vmatpush.msra.mxu0 %v373
    %496 = vmatpush.msra.mxu0 %v364
    %497 = vmatpush.msra.mxu0 %v355
    %498 = vmatpush.msra.mxu0 %v346
    %499 = vmatpush.msra.mxu0 %v337
    %500 = vmatpush.msra.mxu0 %v328
    %501 = vmatpush.msra.mxu0 %v319
    %502 = vmatpush.msra.mxu0 %v310
    %503 = vmatpush.msra.mxu0 %v301
    %504 = vmatpush.msra.mxu0 %v292
    %505 = vmatpush.msra.mxu0 %v283
    %506 = vmatpush.msra.mxu0 %v274
    %507 = vmatpush.msra.mxu0 %v265
    %508 = vmatpush.msra.mxu0 %v256
    %509 = vmatpush.msra.mxu0 %v247
    %510 = vmatpush.msra.mxu0 %v238
    %511 = vmatmul.f32.gmra.mxu0 %v84
    %v512 = vpop.f32.mrf.mxu0
    %v513 = vadd.f32 %v490, %v512
    %514 = vmatmul.f32.gmra.mxu0 %v86
    %v515 = vpop.f32.mrf.mxu0
    %v516 = vadd.f32 %v493, %v515
    %517 = vdwg.mxu0
    %518 = vmatpush.msra.mxu0 %v230
    %519 = vmatpush.msra.mxu0 %v221
    %520 = vmatpush.msra.mxu0 %v212
    %521 = vmatpush.msra.mxu0 %v203
    %522 = vmatpush.msra.mxu0 %v194
    %523 = vmatpush.msra.mxu0 %v185
    %524 = vmatpush.msra.mxu0 %v176
    %525 = vmatpush.msra.mxu0 %v167
    %526 = vmatpush.msra.mxu0 %v158
    %527 = vmatpush.msra.mxu0 %v149
    %528 = vmatpush.msra.mxu0 %v140
    %529 = vmatpush.msra.mxu0 %v131
    %530 = vmatpush.msra.mxu0 %v122
    %531 = vmatpush.msra.mxu0 %v113
    %532 = vmatpush.msra.mxu0 %v104
    %533 = vmatpush.msra.mxu0 %v95
    %534 = vmatmul.f32.gmra.mxu0 %v83
    %v535 = vpop.f32.mrf.mxu0
    %v536 = vadd.f32 0.0, %v535
    %537 = vmatmul.f32.gmra.mxu0 %v85
    %v538 = vpop.f32.mrf.mxu0
    %v539 = vadd.f32 0.0, %v538
    %540 = vdwg.mxu0
    %541 = vmatpush.msra.mxu0 %v374
    %542 = vmatpush.msra.mxu0 %v365
    %543 = vmatpush.msra.mxu0 %v356
    %544 = vmatpush.msra.mxu0 %v347
    %545 = vmatpush.msra.mxu0 %v338
    %546 = vmatpush.msra.mxu0 %v329
    %547 = vmatpush.msra.mxu0 %v320
    %548 = vmatpush.msra.mxu0 %v311
    %549 = vmatpush.msra.mxu0 %v302
    %550 = vmatpush.msra.mxu0 %v293
    %551 = vmatpush.msra.mxu0 %v284
    %552 = vmatpush.msra.mxu0 %v275
    %553 = vmatpush.msra.mxu0 %v266
    %554 = vmatpush.msra.mxu0 %v257
    %555 = vmatpush.msra.mxu0 %v248
    %556 = vmatpush.msra.mxu0 %v239
    %557 = vmatmul.f32.gmra.mxu0 %v84
    %v558 = vpop.f32.mrf.mxu0
    %v559 = vadd.f32 %v536, %v558
    %560 = vmatmul.f32.gmra.mxu0 %v86
    %v561 = vpop.f32.mrf.mxu0
    %v562 = vadd.f32 %v539, %v561
    %563 = vdwg.mxu0
    %564 = vmatpush.msra.mxu0 %v231
    %565 = vmatpush.msra.mxu0 %v222
    %566 = vmatpush.msra.mxu0 %v213
    %567 = vmatpush.msra.mxu0 %v204
    %568 = vmatpush.msra.mxu0 %v195
    %569 = vmatpush.msra.mxu0 %v186
    %570 = vmatpush.msra.mxu0 %v177
    %571 = vmatpush.msra.mxu0 %v168
    %572 = vmatpush.msra.mxu0 %v159
    %573 = vmatpush.msra.mxu0 %v150
    %574 = vmatpush.msra.mxu0 %v141
    %575 = vmatpush.msra.mxu0 %v132
    %576 = vmatpush.msra.mxu0 %v123
    %577 = vmatpush.msra.mxu0 %v114
    %578 = vmatpush.msra.mxu0 %v105
    %579 = vmatpush.msra.mxu0 %v96
    %580 = vmatmul.f32.gmra.mxu0 %v83
    %v581 = vpop.f32.mrf.mxu0
    %v582 = vadd.f32 0.0, %v581
    %583 = vmatmul.f32.gmra.mxu0 %v85
    %v584 = vpop.f32.mrf.mxu0
    %v585 = vadd.f32 0.0, %v584
    %586 = vdwg.mxu0
    %587 = vmatpush.msra.mxu0 %v375
    %588 = vmatpush.msra.mxu0 %v366
    %589 = vmatpush.msra.mxu0 %v357
    %590 = vmatpush.msra.mxu0 %v348
    %591 = vmatpush.msra.mxu0 %v339
    %592 = vmatpush.msra.mxu0 %v330
    %593 = vmatpush.msra.mxu0 %v321
    %594 = vmatpush.msra.mxu0 %v312
    %595 = vmatpush.msra.mxu0 %v303
    %596 = vmatpush.msra.mxu0 %v294
    %597 = vmatpush.msra.mxu0 %v285
    %598 = vmatpush.msra.mxu0 %v276
    %599 = vmatpush.msra.mxu0 %v267
    %600 = vmatpush.msra.mxu0 %v258
    %601 = vmatpush.msra.mxu0 %v249
    %602 = vmatpush.msra.mxu0 %v240
    %603 = vmatmul.f32.gmra.mxu0 %v84
    %v604 = vpop.f32.mrf.mxu0
    %v605 = vadd.f32 %v582, %v604
    %606 = vmatmul.f32.gmra.mxu0 %v86
    %v607 = vpop.f32.mrf.mxu0
    %v608 = vadd.f32 %v585, %v607
    %609 = vdwg.mxu0
    %610 = vmatpush.msra.mxu0 %v232
    %611 = vmatpush.msra.mxu0 %v223
    %612 = vmatpush.msra.mxu0 %v214
    %613 = vmatpush.msra.mxu0 %v205
    %614 = vmatpush.msra.mxu0 %v196
    %615 = vmatpush.msra.mxu0 %v187
    %616 = vmatpush.msra.mxu0 %v178
    %617 = vmatpush.msra.mxu0 %v169
    %618 = vmatpush.msra.mxu0 %v160
    %619 = vmatpush.msra.mxu0 %v151
    %620 = vmatpush.msra.mxu0 %v142
    %621 = vmatpush.msra.mxu0 %v133
    %622 = vmatpush.msra.mxu0 %v124
    %623 = vmatpush.msra.mxu0 %v115
    %624 = vmatpush.msra.mxu0 %v106
    %625 = vmatpush.msra.mxu0 %v97
    %626 = vmatmul.f32.gmra.mxu0 %v83
    %v627 = vpop.f32.mrf.mxu0
    %v628 = vadd.f32 0.0, %v627
    %629 = vmatmul.f32.gmra.mxu0 %v85
    %v630 = vpop.f32.mrf.mxu0
    %v631 = vadd.f32 0.0, %v630
    %632 = vdwg.mxu0
    %633 = vmatpush.msra.mxu0 %v376
    %634 = vmatpush.msra.mxu0 %v367
    %635 = vmatpush.msra.mxu0 %v358
    %636 = vmatpush.msra.mxu0 %v349
    %637 = vmatpush.msra.mxu0 %v340
    %638 = vmatpush.msra.mxu0 %v331
    %639 = vmatpush.msra.mxu0 %v322
    %640 = vmatpush.msra.mxu0 %v313
    %641 = vmatpush.msra.mxu0 %v304
    %642 = vmatpush.msra.mxu0 %v295
    %643 = vmatpush.msra.mxu0 %v286
    %644 = vmatpush.msra.mxu0 %v277
    %645 = vmatpush.msra.mxu0 %v268
    %646 = vmatpush.msra.mxu0 %v259
    %647 = vmatpush.msra.mxu0 %v250
    %648 = vmatpush.msra.mxu0 %v241
    %649 = vmatmul.f32.gmra.mxu0 %v84
    %v650 = vpop.f32.mrf.mxu0
    %v651 = vadd.f32 %v628, %v650
    %652 = vmatmul.f32.gmra.mxu0 %v86
    %v653 = vpop.f32.mrf.mxu0
    %v654 = vadd.f32 %v631, %v653
    %655 = vdwg.mxu0
    %656 = vmatpush.msra.mxu0 %v233
    %657 = vmatpush.msra.mxu0 %v224
    %658 = vmatpush.msra.mxu0 %v215
    %659 = vmatpush.msra.mxu0 %v206
    %660 = vmatpush.msra.mxu0 %v197
    %661 = vmatpush.msra.mxu0 %v188
    %662 = vmatpush.msra.mxu0 %v179
    %663 = vmatpush.msra.mxu0 %v170
    %664 = vmatpush.msra.mxu0 %v161
    %665 = vmatpush.msra.mxu0 %v152
    %666 = vmatpush.msra.mxu0 %v143
    %667 = vmatpush.msra.mxu0 %v134
    %668 = vmatpush.msra.mxu0 %v125
    %669 = vmatpush.msra.mxu0 %v116
    %670 = vmatpush.msra.mxu0 %v107
    %671 = vmatpush.msra.mxu0 %v98
    %672 = vmatmul.f32.gmra.mxu0 %v83
    %v673 = vpop.f32.mrf.mxu0
    %v674 = vadd.f32 0.0, %v673
    %675 = vmatmul.f32.gmra.mxu0 %v85
    %v676 = vpop.f32.mrf.mxu0
    %v677 = vadd.f32 0.0, %v676
    %678 = vdwg.mxu0
    %679 = vmatpush.msra.mxu0 %v377
    %680 = vmatpush.msra.mxu0 %v368
    %681 = vmatpush.msra.mxu0 %v359
    %682 = vmatpush.msra.mxu0 %v350
    %683 = vmatpush.msra.mxu0 %v341
    %684 = vmatpush.msra.mxu0 %v332
    %685 = vmatpush.msra.mxu0 %v323
    %686 = vmatpush.msra.mxu0 %v314
    %687 = vmatpush.msra.mxu0 %v305
    %688 = vmatpush.msra.mxu0 %v296
    %689 = vmatpush.msra.mxu0 %v287
    %690 = vmatpush.msra.mxu0 %v278
    %691 = vmatpush.msra.mxu0 %v269
    %692 = vmatpush.msra.mxu0 %v260
    %693 = vmatpush.msra.mxu0 %v251
    %694 = vmatpush.msra.mxu0 %v242
    %695 = vmatmul.f32.gmra.mxu0 %v84
    %v696 = vpop.f32.mrf.mxu0
    %v697 = vadd.f32 %v674, %v696
    %698 = vmatmul.f32.gmra.mxu0 %v86
    %v699 = vpop.f32.mrf.mxu0
    %v700 = vadd.f32 %v677, %v699
    %701 = vdwg.mxu0
    %702 = vmatpush.msra.mxu0 %v234
    %703 = vmatpush.msra.mxu0 %v225
    %704 = vmatpush.msra.mxu0 %v216
    %705 = vmatpush.msra.mxu0 %v207
    %706 = vmatpush.msra.mxu0 %v198
    %707 = vmatpush.msra.mxu0 %v189
    %708 = vmatpush.msra.mxu0 %v180
    %709 = vmatpush.msra.mxu0 %v171
    %710 = vmatpush.msra.mxu0 %v162
    %711 = vmatpush.msra.mxu0 %v153
    %712 = vmatpush.msra.mxu0 %v144
    %713 = vmatpush.msra.mxu0 %v135
    %714 = vmatpush.msra.mxu0 %v126
    %715 = vmatpush.msra.mxu0 %v117
    %716 = vmatpush.msra.mxu0 %v108
    %717 = vmatpush.msra.mxu0 %v99
    %718 = vmatmul.f32.gmra.mxu0 %v83
    %v719 = vpop.f32.mrf.mxu0
    %v720 = vadd.f32 0.0, %v719
    %721 = vmatmul.f32.gmra.mxu0 %v85
    %v722 = vpop.f32.mrf.mxu0
    %v723 = vadd.f32 0.0, %v722
    %724 = vdwg.mxu0
    %725 = vmatpush.msra.mxu0 %v378
    %726 = vmatpush.msra.mxu0 %v369
    %727 = vmatpush.msra.mxu0 %v360
    %728 = vmatpush.msra.mxu0 %v351
    %729 = vmatpush.msra.mxu0 %v342
    %730 = vmatpush.msra.mxu0 %v333
    %731 = vmatpush.msra.mxu0 %v324
    %732 = vmatpush.msra.mxu0 %v315
    %733 = vmatpush.msra.mxu0 %v306
    %734 = vmatpush.msra.mxu0 %v297
    %735 = vmatpush.msra.mxu0 %v288
    %736 = vmatpush.msra.mxu0 %v279
    %737 = vmatpush.msra.mxu0 %v270
    %738 = vmatpush.msra.mxu0 %v261
    %739 = vmatpush.msra.mxu0 %v252
    %740 = vmatpush.msra.mxu0 %v243
    %741 = vmatmul.f32.gmra.mxu0 %v84
    %v742 = vpop.f32.mrf.mxu0
    %v743 = vadd.f32 %v720, %v742
    %744 = vmatmul.f32.gmra.mxu0 %v86
    %v745 = vpop.f32.mrf.mxu0
    %v746 = vadd.f32 %v723, %v745
    %747 = vdwg.mxu0
    %748 = vmatpush.msra.mxu0 %v235
    %749 = vmatpush.msra.mxu0 %v226
    %750 = vmatpush.msra.mxu0 %v217
    %751 = vmatpush.msra.mxu0 %v208
    %752 = vmatpush.msra.mxu0 %v199
    %753 = vmatpush.msra.mxu0 %v190
    %754 = vmatpush.msra.mxu0 %v181
    %755 = vmatpush.msra.mxu0 %v172
    %756 = vmatpush.msra.mxu0 %v163
    %757 = vmatpush.msra.mxu0 %v154
    %758 = vmatpush.msra.mxu0 %v145
    %759 = vmatpush.msra.mxu0 %v136
    %760 = vmatpush.msra.mxu0 %v127
    %761 = vmatpush.msra.mxu0 %v118
    %762 = vmatpush.msra.mxu0 %v109
    %763 = vmatpush.msra.mxu0 %v100
    %764 = vmatmul.f32.gmra.mxu0 %v83
    %v765 = vpop.f32.mrf.mxu0
    %v766 = vadd.f32 0.0, %v765
    %767 = vmatmul.f32.gmra.mxu0 %v85
    %v768 = vpop.f32.mrf.mxu0
    %v769 = vadd.f32 0.0, %v768
    %770 = vdwg.mxu0
    %771 = vmatpush.msra.mxu0 %v379
    %772 = vmatpush.msra.mxu0 %v370
    %773 = vmatpush.msra.mxu0 %v361
    %774 = vmatpush.msra.mxu0 %v352
    %775 = vmatpush.msra.mxu0 %v343
    %776 = vmatpush.msra.mxu0 %v334
    %777 = vmatpush.msra.mxu0 %v325
    %778 = vmatpush.msra.mxu0 %v316
    %779 = vmatpush.msra.mxu0 %v307
    %780 = vmatpush.msra.mxu0 %v298
    %781 = vmatpush.msra.mxu0 %v289
    %782 = vmatpush.msra.mxu0 %v280
    %783 = vmatpush.msra.mxu0 %v271
    %784 = vmatpush.msra.mxu0 %v262
    %785 = vmatpush.msra.mxu0 %v253
    %786 = vmatpush.msra.mxu0 %v244
    %787 = vmatmul.f32.gmra.mxu0 %v84
    %v788 = vpop.f32.mrf.mxu0
    %v789 = vadd.f32 %v766, %v788
    %790 = vmatmul.f32.gmra.mxu0 %v86
    %v791 = vpop.f32.mrf.mxu0
    %v792 = vadd.f32 %v769, %v791
    %793 = vdwg.mxu0
    %v794 = vld [vmem:[#allocation4] sm:$0xff]
    %v795 = vld [vmem:[#allocation4 + $0x8] sm:$0xff]
    %v796 = vld [vmem:[#allocation4 + $0x10] sm:$0xff]
    %v797 = vld [vmem:[#allocation4 + $0x18] sm:$0xff]
    %v798 = vld [vmem:[#allocation4 + $0x20] sm:$0xff]
    %v799 = vld [vmem:[#allocation4 + $0x28] sm:$0xff]
    %v800 = vld [vmem:[#allocation4 + $0x30] sm:$0xff]
    %v801 = vld [vmem:[#allocation4 + $0x38] sm:$0xff]
    %v802 = vld [vmem:[#allocation4 + $0x40] sm:$0xff]
    %v803 = vld [vmem:[#allocation4 + $0x48] sm:$0xff]
    %v804 = vld [vmem:[#allocation4 + $0x50] sm:$0xff]
    %v805 = vld [vmem:[#allocation4 + $0x58] sm:$0xff]
    %v806 = vld [vmem:[#allocation4 + $0x60] sm:$0xff]
    %v807 = vld [vmem:[#allocation4 + $0x68] sm:$0xff]
    %v808 = vld [vmem:[#allocation4 + $0x70] sm:$0xff]
    %v809 = vld [vmem:[#allocation4 + $0x78] sm:$0xff]
    %v810 = vld [vmem:[#allocation4 + $0x80] sm:$0xff]
    %v811 = vld [vmem:[#allocation4 + $0x88] sm:$0xff]
    %v812 = vld [vmem:[#allocation4 + $0x90] sm:$0xff]
    %v813 = vld [vmem:[#allocation4 + $0x98] sm:$0xff]
    %v814 = vld [vmem:[#allocation4 + $0xa0] sm:$0xff]
    %v815 = vld [vmem:[#allocation4 + $0xa8] sm:$0xff]
    %v816 = vld [vmem:[#allocation4 + $0xb0] sm:$0xff]
    %v817 = vld [vmem:[#allocation4 + $0xb8] sm:$0xff]
    %v818 = vld [vmem:[#allocation4 + $0xc0] sm:$0xff]
    %v819 = vld [vmem:[#allocation4 + $0xc8] sm:$0xff]
    %v820 = vld [vmem:[#allocation4 + $0xd0] sm:$0xff]
    %v821 = vld [vmem:[#allocation4 + $0xd8] sm:$0xff]
    %v822 = vld [vmem:[#allocation4 + $0xe0] sm:$0xff]
    %v823 = vld [vmem:[#allocation4 + $0xe8] sm:$0xff]
    %v824 = vld [vmem:[#allocation4 + $0xf0] sm:$0xff]
    %v825 = vld [vmem:[#allocation4 + $0xf8] sm:$0xff]
    %v826 = vld [vmem:[#allocation7] sm:$0xff]
    %v827 = vld [vmem:[#allocation7 + $0x8] sm:$0xff]
    %v828 = vld [vmem:[#allocation7 + $0x10] sm:$0xff]
    %v829 = vld [vmem:[#allocation7 + $0x18] sm:$0xff]
    %v830 = vld [vmem:[#allocation7 + $0x20] sm:$0xff]
    %v831 = vld [vmem:[#allocation7 + $0x28] sm:$0xff]
    %v832 = vld [vmem:[#allocation7 + $0x30] sm:$0xff]
    %v833 = vld [vmem:[#allocation7 + $0x38] sm:$0xff]
    %v834 = vld [vmem:[#allocation7 + $0x40] sm:$0xff]
    %v835 = vld [vmem:[#allocation7 + $0x48] sm:$0xff]
    %v836 = vld [vmem:[#allocation7 + $0x50] sm:$0xff]
    %v837 = vld [vmem:[#allocation7 + $0x58] sm:$0xff]
    %v838 = vld [vmem:[#allocation7 + $0x60] sm:$0xff]
    %v839 = vld [vmem:[#allocation7 + $0x68] sm:$0xff]
    %v840 = vld [vmem:[#allocation7 + $0x70] sm:$0xff]
    %v841 = vld [vmem:[#allocation7 + $0x78] sm:$0xff]
    %v842 = vld [vmem:[#allocation7 + $0x80] sm:$0xff]
    %v843 = vld [vmem:[#allocation7 + $0x88] sm:$0xff]
    %v844 = vld [vmem:[#allocation7 + $0x90] sm:$0xff]
    %v845 = vld [vmem:[#allocation7 + $0x98] sm:$0xff]
    %v846 = vld [vmem:[#allocation7 + $0xa0] sm:$0xff]
    %v847 = vld [vmem:[#allocation7 + $0xa8] sm:$0xff]
    %v848 = vld [vmem:[#allocation7 + $0xb0] sm:$0xff]
    %v849 = vld [vmem:[#allocation7 + $0xb8] sm:$0xff]
    %v850 = vld [vmem:[#allocation7 + $0xc0] sm:$0xff]
    %v851 = vld [vmem:[#allocation7 + $0xc8] sm:$0xff]
    %v852 = vld [vmem:[#allocation7 + $0xd0] sm:$0xff]
    %v853 = vld [vmem:[#allocation7 + $0xd8] sm:$0xff]
    %v854 = vld [vmem:[#allocation7 + $0xe0] sm:$0xff]
    %v855 = vld [vmem:[#allocation7 + $0xe8] sm:$0xff]
    %v856 = vld [vmem:[#allocation7 + $0xf0] sm:$0xff]
    %v857 = vld [vmem:[#allocation7 + $0xf8] sm:$0xff]
    %859 = vset.pattern.permute.xlu0 0
    %860 = vperm.xlu0 %859, %v826
    %v861 = vpop.permute.xlu0 %860
    %864 = vset.pattern.permute.xlu0 0
    %865 = vperm.xlu0 %864, %v827
    %v866 = vpop.permute.xlu0 %865
    %869 = vset.pattern.permute.xlu0 0
    %870 = vperm.xlu0 %869, %v828
    %v871 = vpop.permute.xlu0 %870
    %874 = vset.pattern.permute.xlu0 0
    %875 = vperm.xlu0 %874, %v829
    %v876 = vpop.permute.xlu0 %875
    %879 = vset.pattern.permute.xlu0 0
    %880 = vperm.xlu0 %879, %v830
    %v881 = vpop.permute.xlu0 %880
    %884 = vset.pattern.permute.xlu0 0
    %885 = vperm.xlu0 %884, %v831
    %v886 = vpop.permute.xlu0 %885
    %889 = vset.pattern.permute.xlu0 0
    %890 = vperm.xlu0 %889, %v832
    %v891 = vpop.permute.xlu0 %890
    %894 = vset.pattern.permute.xlu0 0
    %895 = vperm.xlu0 %894, %v833
    %v896 = vpop.permute.xlu0 %895
    %899 = vset.pattern.permute.xlu0 0
    %900 = vperm.xlu0 %899, %v834
    %v901 = vpop.permute.xlu0 %900
    %904 = vset.pattern.permute.xlu0 0
    %905 = vperm.xlu0 %904, %v835
    %v906 = vpop.permute.xlu0 %905
    %909 = vset.pattern.permute.xlu0 0
    %910 = vperm.xlu0 %909, %v836
    %v911 = vpop.permute.xlu0 %910
    %914 = vset.pattern.permute.xlu0 0
    %915 = vperm.xlu0 %914, %v837
    %v916 = vpop.permute.xlu0 %915
    %919 = vset.pattern.permute.xlu0 0
    %920 = vperm.xlu0 %919, %v838
    %v921 = vpop.permute.xlu0 %920
    %924 = vset.pattern.permute.xlu0 0
    %925 = vperm.xlu0 %924, %v839
    %v926 = vpop.permute.xlu0 %925
    %929 = vset.pattern.permute.xlu0 0
    %930 = vperm.xlu0 %929, %v840
    %v931 = vpop.permute.xlu0 %930
    %934 = vset.pattern.permute.xlu0 0
    %935 = vperm.xlu0 %934, %v841
    %v936 = vpop.permute.xlu0 %935
    %939 = vset.pattern.permute.xlu0 0
    %940 = vperm.xlu0 %939, %v842
    %v941 = vpop.permute.xlu0 %940
    %944 = vset.pattern.permute.xlu0 0
    %945 = vperm.xlu0 %944, %v843
    %v946 = vpop.permute.xlu0 %945
    %949 = vset.pattern.permute.xlu0 0
    %950 = vperm.xlu0 %949, %v844
    %v951 = vpop.permute.xlu0 %950
    %954 = vset.pattern.permute.xlu0 0
    %955 = vperm.xlu0 %954, %v845
    %v956 = vpop.permute.xlu0 %955
    %959 = vset.pattern.permute.xlu0 0
    %960 = vperm.xlu0 %959, %v846
    %v961 = vpop.permute.xlu0 %960
    %964 = vset.pattern.permute.xlu0 0
    %965 = vperm.xlu0 %964, %v847
    %v966 = vpop.permute.xlu0 %965
    %969 = vset.pattern.permute.xlu0 0
    %970 = vperm.xlu0 %969, %v848
    %v971 = vpop.permute.xlu0 %970
    %974 = vset.pattern.permute.xlu0 0
    %975 = vperm.xlu0 %974, %v849
    %v976 = vpop.permute.xlu0 %975
    %979 = vset.pattern.permute.xlu0 0
    %980 = vperm.xlu0 %979, %v850
    %v981 = vpop.permute.xlu0 %980
    %984 = vset.pattern.permute.xlu0 0
    %985 = vperm.xlu0 %984, %v851
    %v986 = vpop.permute.xlu0 %985
    %989 = vset.pattern.permute.xlu0 0
    %990 = vperm.xlu0 %989, %v852
    %v991 = vpop.permute.xlu0 %990
    %994 = vset.pattern.permute.xlu0 0
    %995 = vperm.xlu0 %994, %v853
    %v996 = vpop.permute.xlu0 %995
    %999 = vset.pattern.permute.xlu0 0
    %1000 = vperm.xlu0 %999, %v854
    %v1001 = vpop.permute.xlu0 %1000
    %1004 = vset.pattern.permute.xlu0 0
    %1005 = vperm.xlu0 %1004, %v855
    %v1006 = vpop.permute.xlu0 %1005
    %1009 = vset.pattern.permute.xlu0 0
    %1010 = vperm.xlu0 %1009, %v856
    %v1011 = vpop.permute.xlu0 %1010
    %1014 = vset.pattern.permute.xlu0 0
    %1015 = vperm.xlu0 %1014, %v857
    %v1016 = vpop.permute.xlu0 %1015
    %vm1018 = vcmask 588800
    %v1020 = vsel %vm1018, %v794, 0
    %v1023 = vsel %vm1018, %v795, 0
    %v1026 = vsel %vm1018, %v796, 0
    %v1029 = vsel %vm1018, %v797, 0
    %v1032 = vsel %vm1018, %v798, 0
    %v1035 = vsel %vm1018, %v799, 0
    %v1038 = vsel %vm1018, %v800, 0
    %v1041 = vsel %vm1018, %v801, 0
    %v1044 = vsel %vm1018, %v802, 0
    %v1047 = vsel %vm1018, %v803, 0
    %v1050 = vsel %vm1018, %v804, 0
    %v1053 = vsel %vm1018, %v805, 0
    %v1056 = vsel %vm1018, %v806, 0
    %v1059 = vsel %vm1018, %v807, 0
    %v1062 = vsel %vm1018, %v808, 0
    %v1065 = vsel %vm1018, %v809, 0
    %v1068 = vsel %vm1018, %v810, 0
    %v1071 = vsel %vm1018, %v811, 0
    %v1074 = vsel %vm1018, %v812, 0
    %v1077 = vsel %vm1018, %v813, 0
    %v1080 = vsel %vm1018, %v814, 0
    %v1083 = vsel %vm1018, %v815, 0
    %v1086 = vsel %vm1018, %v816, 0
    %v1089 = vsel %vm1018, %v817, 0
    %v1092 = vsel %vm1018, %v818, 0
    %v1095 = vsel %vm1018, %v819, 0
    %v1098 = vsel %vm1018, %v820, 0
    %v1101 = vsel %vm1018, %v821, 0
    %v1104 = vsel %vm1018, %v822, 0
    %v1107 = vsel %vm1018, %v823, 0
    %v1110 = vsel %vm1018, %v824, 0
    %v1113 = vsel %vm1018, %v825, 0
    %1115 = vmatpush.msra.mxu0 0.0
    %1116 = vmatpush.msra.mxu0 0.0
    %1117 = vmatpush.msra.mxu0 0.0
    %1118 = vmatpush.msra.mxu0 0.0
    %1119 = vmatpush.msra.mxu0 0.0
    %1120 = vmatpush.msra.mxu0 0.0
    %1121 = vmatpush.msra.mxu0 0.0
    %1122 = vmatpush.msra.mxu0 %v789
    %1123 = vmatpush.msra.mxu0 %v743
    %1124 = vmatpush.msra.mxu0 %v697
    %1125 = vmatpush.msra.mxu0 %v651
    %1126 = vmatpush.msra.mxu0 %v605
    %1127 = vmatpush.msra.mxu0 %v559
    %1128 = vmatpush.msra.mxu0 %v513
    %1129 = vmatpush.msra.mxu0 %v467
    %1130 = vmatpush.msra.mxu0 %v421
    %1131 = vmatmul.f32.gmra.mxu0 %v1020
    %v1132 = vpop.f32.mrf.mxu0
    %v1133 = vadd.f32 %v861, %v1132
    %1134 = vmatmul.f32.gmra.mxu0 %v1023
    %v1135 = vpop.f32.mrf.mxu0
    %v1136 = vadd.f32 %v866, %v1135
    %1137 = vmatmul.f32.gmra.mxu0 %v1026
    %v1138 = vpop.f32.mrf.mxu0
    %v1139 = vadd.f32 %v871, %v1138
    %1140 = vmatmul.f32.gmra.mxu0 %v1029
    %v1141 = vpop.f32.mrf.mxu0
    %v1142 = vadd.f32 %v876, %v1141
    %1143 = vmatmul.f32.gmra.mxu0 %v1032
    %v1144 = vpop.f32.mrf.mxu0
    %v1145 = vadd.f32 %v881, %v1144
    %1146 = vmatmul.f32.gmra.mxu0 %v1035
    %v1147 = vpop.f32.mrf.mxu0
    %v1148 = vadd.f32 %v886, %v1147
    %1149 = vmatmul.f32.gmra.mxu0 %v1038
    %v1150 = vpop.f32.mrf.mxu0
    %v1151 = vadd.f32 %v891, %v1150
    %1152 = vmatmul.f32.gmra.mxu0 %v1041
    %v1153 = vpop.f32.mrf.mxu0
    %v1154 = vadd.f32 %v896, %v1153
    %1155 = vmatmul.f32.gmra.mxu0 %v1044
    %v1156 = vpop.f32.mrf.mxu0
    %v1157 = vadd.f32 %v901, %v1156
    %1158 = vmatmul.f32.gmra.mxu0 %v1047
    %v1159 = vpop.f32.mrf.mxu0
    %v1160 = vadd.f32 %v906, %v1159
    %1161 = vmatmul.f32.gmra.mxu0 %v1050
    %v1162 = vpop.f32.mrf.mxu0
    %v1163 = vadd.f32 %v911, %v1162
    %1164 = vmatmul.f32.gmra.mxu0 %v1053
    %v1165 = vpop.f32.mrf.mxu0
    %v1166 = vadd.f32 %v916, %v1165
    %1167 = vmatmul.f32.gmra.mxu0 %v1056
    %v1168 = vpop.f32.mrf.mxu0
    %v1169 = vadd.f32 %v921, %v1168
    %1170 = vmatmul.f32.gmra.mxu0 %v1059
    %v1171 = vpop.f32.mrf.mxu0
    %v1172 = vadd.f32 %v926, %v1171
    %1173 = vmatmul.f32.gmra.mxu0 %v1062
    %v1174 = vpop.f32.mrf.mxu0
    %v1175 = vadd.f32 %v931, %v1174
    %1176 = vmatmul.f32.gmra.mxu0 %v1065
    %v1177 = vpop.f32.mrf.mxu0
    %v1178 = vadd.f32 %v936, %v1177
    %1179 = vmatmul.f32.gmra.mxu0 %v1068
    %v1180 = vpop.f32.mrf.mxu0
    %v1181 = vadd.f32 %v941, %v1180
    %1182 = vmatmul.f32.gmra.mxu0 %v1071
    %v1183 = vpop.f32.mrf.mxu0
    %v1184 = vadd.f32 %v946, %v1183
    %1185 = vmatmul.f32.gmra.mxu0 %v1074
    %v1186 = vpop.f32.mrf.mxu0
    %v1187 = vadd.f32 %v951, %v1186
    %1188 = vmatmul.f32.gmra.mxu0 %v1077
    %v1189 = vpop.f32.mrf.mxu0
    %v1190 = vadd.f32 %v956, %v1189
    %1191 = vmatmul.f32.gmra.mxu0 %v1080
    %v1192 = vpop.f32.mrf.mxu0
    %v1193 = vadd.f32 %v961, %v1192
    %1194 = vmatmul.f32.gmra.mxu0 %v1083
    %v1195 = vpop.f32.mrf.mxu0
    %v1196 = vadd.f32 %v966, %v1195
    %1197 = vmatmul.f32.gmra.mxu0 %v1086
    %v1198 = vpop.f32.mrf.mxu0
    %v1199 = vadd.f32 %v971, %v1198
    %1200 = vmatmul.f32.gmra.mxu0 %v1089
    %v1201 = vpop.f32.mrf.mxu0
    %v1202 = vadd.f32 %v976, %v1201
    %1203 = vmatmul.f32.gmra.mxu0 %v1092
    %v1204 = vpop.f32.mrf.mxu0
    %v1205 = vadd.f32 %v981, %v1204
    %1206 = vmatmul.f32.gmra.mxu0 %v1095
    %v1207 = vpop.f32.mrf.mxu0
    %v1208 = vadd.f32 %v986, %v1207
    %1209 = vmatmul.f32.gmra.mxu0 %v1098
    %v1210 = vpop.f32.mrf.mxu0
    %v1211 = vadd.f32 %v991, %v1210
    %1212 = vmatmul.f32.gmra.mxu0 %v1101
    %v1213 = vpop.f32.mrf.mxu0
    %v1214 = vadd.f32 %v996, %v1213
    %1215 = vmatmul.f32.gmra.mxu0 %v1104
    %v1216 = vpop.f32.mrf.mxu0
    %v1217 = vadd.f32 %v1001, %v1216
    %1218 = vmatmul.f32.gmra.mxu0 %v1107
    %v1219 = vpop.f32.mrf.mxu0
    %v1220 = vadd.f32 %v1006, %v1219
    %1221 = vmatmul.f32.gmra.mxu0 %v1110
    %v1222 = vpop.f32.mrf.mxu0
    %v1223 = vadd.f32 %v1011, %v1222
    %1224 = vmatmul.f32.gmra.mxu0 %v1113
    %v1225 = vpop.f32.mrf.mxu0
    %v1226 = vadd.f32 %v1016, %v1225
    %1227 = vdwg.mxu0
    %1228 = vmatpush.msra.mxu0 0.0
    %1229 = vmatpush.msra.mxu0 0.0
    %1230 = vmatpush.msra.mxu0 0.0
    %1231 = vmatpush.msra.mxu0 0.0
    %1232 = vmatpush.msra.mxu0 0.0
    %1233 = vmatpush.msra.mxu0 0.0
    %1234 = vmatpush.msra.mxu0 0.0
    %1235 = vmatpush.msra.mxu0 %v792
    %1236 = vmatpush.msra.mxu0 %v746
    %1237 = vmatpush.msra.mxu0 %v700
    %1238 = vmatpush.msra.mxu0 %v654
    %1239 = vmatpush.msra.mxu0 %v608
    %1240 = vmatpush.msra.mxu0 %v562
    %1241 = vmatpush.msra.mxu0 %v516
    %1242 = vmatpush.msra.mxu0 %v470
    %1243 = vmatpush.msra.mxu0 %v424
    %1244 = vmatmul.f32.gmra.mxu0 %v1020
    %v1245 = vpop.f32.mrf.mxu0
    %v1246 = vadd.f32 %v861, %v1245
    %1247 = vmatmul.f32.gmra.mxu0 %v1023
    %v1248 = vpop.f32.mrf.mxu0
    %v1249 = vadd.f32 %v866, %v1248
    %1250 = vmatmul.f32.gmra.mxu0 %v1026
    %v1251 = vpop.f32.mrf.mxu0
    %v1252 = vadd.f32 %v871, %v1251
    %1253 = vmatmul.f32.gmra.mxu0 %v1029
    %v1254 = vpop.f32.mrf.mxu0
    %v1255 = vadd.f32 %v876, %v1254
    %1256 = vmatmul.f32.gmra.mxu0 %v1032
    %v1257 = vpop.f32.mrf.mxu0
    %v1258 = vadd.f32 %v881, %v1257
    %1259 = vmatmul.f32.gmra.mxu0 %v1035
    %v1260 = vpop.f32.mrf.mxu0
    %v1261 = vadd.f32 %v886, %v1260
    %1262 = vmatmul.f32.gmra.mxu0 %v1038
    %v1263 = vpop.f32.mrf.mxu0
    %v1264 = vadd.f32 %v891, %v1263
    %1265 = vmatmul.f32.gmra.mxu0 %v1041
    %v1266 = vpop.f32.mrf.mxu0
    %v1267 = vadd.f32 %v896, %v1266
    %1268 = vmatmul.f32.gmra.mxu0 %v1044
    %v1269 = vpop.f32.mrf.mxu0
    %v1270 = vadd.f32 %v901, %v1269
    %1271 = vmatmul.f32.gmra.mxu0 %v1047
    %v1272 = vpop.f32.mrf.mxu0
    %v1273 = vadd.f32 %v906, %v1272
    %1274 = vmatmul.f32.gmra.mxu0 %v1050
    %v1275 = vpop.f32.mrf.mxu0
    %v1276 = vadd.f32 %v911, %v1275
    %1277 = vmatmul.f32.gmra.mxu0 %v1053
    %v1278 = vpop.f32.mrf.mxu0
    %v1279 = vadd.f32 %v916, %v1278
    %1280 = vmatmul.f32.gmra.mxu0 %v1056
    %v1281 = vpop.f32.mrf.mxu0
    %v1282 = vadd.f32 %v921, %v1281
    %1283 = vmatmul.f32.gmra.mxu0 %v1059
    %v1284 = vpop.f32.mrf.mxu0
    %v1285 = vadd.f32 %v926, %v1284
    %1286 = vmatmul.f32.gmra.mxu0 %v1062
    %v1287 = vpop.f32.mrf.mxu0
    %v1288 = vadd.f32 %v931, %v1287
    %1289 = vmatmul.f32.gmra.mxu0 %v1065
    %v1290 = vpop.f32.mrf.mxu0
    %v1291 = vadd.f32 %v936, %v1290
    %1292 = vmatmul.f32.gmra.mxu0 %v1068
    %v1293 = vpop.f32.mrf.mxu0
    %v1294 = vadd.f32 %v941, %v1293
    %1295 = vmatmul.f32.gmra.mxu0 %v1071
    %v1296 = vpop.f32.mrf.mxu0
    %v1297 = vadd.f32 %v946, %v1296
    %1298 = vmatmul.f32.gmra.mxu0 %v1074
    %v1299 = vpop.f32.mrf.mxu0
    %v1300 = vadd.f32 %v951, %v1299
    %1301 = vmatmul.f32.gmra.mxu0 %v1077
    %v1302 = vpop.f32.mrf.mxu0
    %v1303 = vadd.f32 %v956, %v1302
    %1304 = vmatmul.f32.gmra.mxu0 %v1080
    %v1305 = vpop.f32.mrf.mxu0
    %v1306 = vadd.f32 %v961, %v1305
    %1307 = vmatmul.f32.gmra.mxu0 %v1083
    %v1308 = vpop.f32.mrf.mxu0
    %v1309 = vadd.f32 %v966, %v1308
    %1310 = vmatmul.f32.gmra.mxu0 %v1086
    %v1311 = vpop.f32.mrf.mxu0
    %v1312 = vadd.f32 %v971, %v1311
    %1313 = vmatmul.f32.gmra.mxu0 %v1089
    %v1314 = vpop.f32.mrf.mxu0
    %v1315 = vadd.f32 %v976, %v1314
    %1316 = vmatmul.f32.gmra.mxu0 %v1092
    %v1317 = vpop.f32.mrf.mxu0
    %v1318 = vadd.f32 %v981, %v1317
    %1319 = vmatmul.f32.gmra.mxu0 %v1095
    %v1320 = vpop.f32.mrf.mxu0
    %v1321 = vadd.f32 %v986, %v1320
    %1322 = vmatmul.f32.gmra.mxu0 %v1098
    %v1323 = vpop.f32.mrf.mxu0
    %v1324 = vadd.f32 %v991, %v1323
    %1325 = vmatmul.f32.gmra.mxu0 %v1101
    %v1326 = vpop.f32.mrf.mxu0
    %v1327 = vadd.f32 %v996, %v1326
    %1328 = vmatmul.f32.gmra.mxu0 %v1104
    %v1329 = vpop.f32.mrf.mxu0
    %v1330 = vadd.f32 %v1001, %v1329
    %1331 = vmatmul.f32.gmra.mxu0 %v1107
    %v1332 = vpop.f32.mrf.mxu0
    %v1333 = vadd.f32 %v1006, %v1332
    %1334 = vmatmul.f32.gmra.mxu0 %v1110
    %v1335 = vpop.f32.mrf.mxu0
    %v1336 = vadd.f32 %v1011, %v1335
    %1337 = vmatmul.f32.gmra.mxu0 %v1113
    %v1338 = vpop.f32.mrf.mxu0
    %v1339 = vadd.f32 %v1016, %v1338
    %1340 = vdwg.mxu0
    %v1341 = vld [vmem:[#allocation6] sm:$0xff]
    %v1342 = vld [vmem:[#allocation6 + $0x8] sm:$0xff]
    %v1343 = vld [vmem:[#allocation6 + $0x10] sm:$0xff]
    %v1344 = vld [vmem:[#allocation6 + $0x18] sm:$0xff]
    %v1345 = vld [vmem:[#allocation6 + $0x20] sm:$0xff]
    %v1346 = vld [vmem:[#allocation6 + $0x28] sm:$0xff]
    %v1347 = vld [vmem:[#allocation6 + $0x30] sm:$0xff]
    %v1348 = vld [vmem:[#allocation6 + $0x38] sm:$0xff]
    %v1349 = vld [vmem:[#allocation6 + $0x40] sm:$0xff]
    %v1350 = vld [vmem:[#allocation6 + $0x48] sm:$0xff]
    %v1351 = vld [vmem:[#allocation6 + $0x50] sm:$0xff]
    %v1352 = vld [vmem:[#allocation6 + $0x58] sm:$0xff]
    %v1353 = vld [vmem:[#allocation6 + $0x60] sm:$0xff]
    %v1354 = vld [vmem:[#allocation6 + $0x68] sm:$0xff]
    %v1355 = vld [vmem:[#allocation6 + $0x70] sm:$0xff]
    %v1356 = vld [vmem:[#allocation6 + $0x78] sm:$0xff]
    %v1357 = vld [vmem:[#allocation6 + $0x80] sm:$0xff]
    %v1358 = vld [vmem:[#allocation6 + $0x88] sm:$0xff]
    %v1359 = vld [vmem:[#allocation6 + $0x90] sm:$0xff]
    %v1360 = vld [vmem:[#allocation6 + $0x98] sm:$0xff]
    %v1361 = vld [vmem:[#allocation6 + $0xa0] sm:$0xff]
    %v1362 = vld [vmem:[#allocation6 + $0xa8] sm:$0xff]
    %v1363 = vld [vmem:[#allocation6 + $0xb0] sm:$0xff]
    %v1364 = vld [vmem:[#allocation6 + $0xb8] sm:$0xff]
    %v1365 = vld [vmem:[#allocation6 + $0xc0] sm:$0xff]
    %v1366 = vld [vmem:[#allocation6 + $0xc8] sm:$0xff]
    %v1367 = vld [vmem:[#allocation6 + $0xd0] sm:$0xff]
    %v1368 = vld [vmem:[#allocation6 + $0xd8] sm:$0xff]
    %v1369 = vld [vmem:[#allocation6 + $0xe0] sm:$0xff]
    %v1370 = vld [vmem:[#allocation6 + $0xe8] sm:$0xff]
    %v1371 = vld [vmem:[#allocation6 + $0xf0] sm:$0xff]
    %v1372 = vld [vmem:[#allocation6 + $0xf8] sm:$0xff]
    %1373 = vmatpush.msra.mxu0 %v1371
    %1374 = vmatpush.msra.mxu0 %v1369
    %1375 = vmatpush.msra.mxu0 %v1367
    %1376 = vmatpush.msra.mxu0 %v1365
    %1377 = vmatpush.msra.mxu0 %v1363
    %1378 = vmatpush.msra.mxu0 %v1361
    %1379 = vmatpush.msra.mxu0 %v1359
    %1380 = vmatpush.msra.mxu0 %v1357
    %1381 = vmatpush.msra.mxu0 %v1355
    %1382 = vmatpush.msra.mxu0 %v1353
    %1383 = vmatpush.msra.mxu0 %v1351
    %1384 = vmatpush.msra.mxu0 %v1349
    %1385 = vmatpush.msra.mxu0 %v1347
    %1386 = vmatpush.msra.mxu0 %v1345
    %1387 = vmatpush.msra.mxu0 %v1343
    %1388 = vmatpush.msra.mxu0 %v1341
    %1389 = vmatmul.f32.gmra.mxu0 %v1133
    %v1390 = vpop.f32.mrf.mxu0
    %v1391 = vadd.f32 0.0, %v1390
    %1392 = vmatmul.f32.gmra.mxu0 %v1136
    %v1393 = vpop.f32.mrf.mxu0
    %v1394 = vadd.f32 0.0, %v1393
    %1395 = vmatmul.f32.gmra.mxu0 %v1139
    %v1396 = vpop.f32.mrf.mxu0
    %v1397 = vadd.f32 0.0, %v1396
    %1398 = vmatmul.f32.gmra.mxu0 %v1142
    %v1399 = vpop.f32.mrf.mxu0
    %v1400 = vadd.f32 0.0, %v1399
    %1401 = vmatmul.f32.gmra.mxu0 %v1145
    %v1402 = vpop.f32.mrf.mxu0
    %v1403 = vadd.f32 0.0, %v1402
    %1404 = vmatmul.f32.gmra.mxu0 %v1148
    %v1405 = vpop.f32.mrf.mxu0
    %v1406 = vadd.f32 0.0, %v1405
    %1407 = vmatmul.f32.gmra.mxu0 %v1151
    %v1408 = vpop.f32.mrf.mxu0
    %v1409 = vadd.f32 0.0, %v1408
    %1410 = vmatmul.f32.gmra.mxu0 %v1154
    %v1411 = vpop.f32.mrf.mxu0
    %v1412 = vadd.f32 0.0, %v1411
    %1413 = vmatmul.f32.gmra.mxu0 %v1246
    %v1414 = vpop.f32.mrf.mxu0
    %v1415 = vadd.f32 0.0, %v1414
    %1416 = vmatmul.f32.gmra.mxu0 %v1249
    %v1417 = vpop.f32.mrf.mxu0
    %v1418 = vadd.f32 0.0, %v1417
    %1419 = vmatmul.f32.gmra.mxu0 %v1252
    %v1420 = vpop.f32.mrf.mxu0
    %v1421 = vadd.f32 0.0, %v1420
    %1422 = vmatmul.f32.gmra.mxu0 %v1255
    %v1423 = vpop.f32.mrf.mxu0
    %v1424 = vadd.f32 0.0, %v1423
    %1425 = vmatmul.f32.gmra.mxu0 %v1258
    %v1426 = vpop.f32.mrf.mxu0
    %v1427 = vadd.f32 0.0, %v1426
    %1428 = vmatmul.f32.gmra.mxu0 %v1261
    %v1429 = vpop.f32.mrf.mxu0
    %v1430 = vadd.f32 0.0, %v1429
    %1431 = vmatmul.f32.gmra.mxu0 %v1264
    %v1432 = vpop.f32.mrf.mxu0
    %v1433 = vadd.f32 0.0, %v1432
    %1434 = vmatmul.f32.gmra.mxu0 %v1267
    %v1435 = vpop.f32.mrf.mxu0
    %v1436 = vadd.f32 0.0, %v1435
    %1437 = vdwg.mxu0
    %1438 = vmatpush.msra.mxu0 %v1372
    %1439 = vmatpush.msra.mxu0 %v1370
    %1440 = vmatpush.msra.mxu0 %v1368
    %1441 = vmatpush.msra.mxu0 %v1366
    %1442 = vmatpush.msra.mxu0 %v1364
    %1443 = vmatpush.msra.mxu0 %v1362
    %1444 = vmatpush.msra.mxu0 %v1360
    %1445 = vmatpush.msra.mxu0 %v1358
    %1446 = vmatpush.msra.mxu0 %v1356
    %1447 = vmatpush.msra.mxu0 %v1354
    %1448 = vmatpush.msra.mxu0 %v1352
    %1449 = vmatpush.msra.mxu0 %v1350
    %1450 = vmatpush.msra.mxu0 %v1348
    %1451 = vmatpush.msra.mxu0 %v1346
    %1452 = vmatpush.msra.mxu0 %v1344
    %1453 = vmatpush.msra.mxu0 %v1342
    %1454 = vmatmul.f32.gmra.mxu0 %v1133
    %v1455 = vpop.f32.mrf.mxu0
    %v1456 = vadd.f32 0.0, %v1455
    %1457 = vmatmul.f32.gmra.mxu0 %v1136
    %v1458 = vpop.f32.mrf.mxu0
    %v1459 = vadd.f32 0.0, %v1458
    %1460 = vmatmul.f32.gmra.mxu0 %v1139
    %v1461 = vpop.f32.mrf.mxu0
    %v1462 = vadd.f32 0.0, %v1461
    %1463 = vmatmul.f32.gmra.mxu0 %v1142
    %v1464 = vpop.f32.mrf.mxu0
    %v1465 = vadd.f32 0.0, %v1464
    %1466 = vmatmul.f32.gmra.mxu0 %v1145
    %v1467 = vpop.f32.mrf.mxu0
    %v1468 = vadd.f32 0.0, %v1467
    %1469 = vmatmul.f32.gmra.mxu0 %v1148
    %v1470 = vpop.f32.mrf.mxu0
    %v1471 = vadd.f32 0.0, %v1470
    %1472 = vmatmul.f32.gmra.mxu0 %v1151
    %v1473 = vpop.f32.mrf.mxu0
    %v1474 = vadd.f32 0.0, %v1473
    %1475 = vmatmul.f32.gmra.mxu0 %v1154
    %v1476 = vpop.f32.mrf.mxu0
    %v1477 = vadd.f32 0.0, %v1476
    %1478 = vmatmul.f32.gmra.mxu0 %v1246
    %v1479 = vpop.f32.mrf.mxu0
    %v1480 = vadd.f32 0.0, %v1479
    %1481 = vmatmul.f32.gmra.mxu0 %v1249
    %v1482 = vpop.f32.mrf.mxu0
    %v1483 = vadd.f32 0.0, %v1482
    %1484 = vmatmul.f32.gmra.mxu0 %v1252
    %v1485 = vpop.f32.mrf.mxu0
    %v1486 = vadd.f32 0.0, %v1485
    %1487 = vmatmul.f32.gmra.mxu0 %v1255
    %v1488 = vpop.f32.mrf.mxu0
    %v1489 = vadd.f32 0.0, %v1488
    %1490 = vmatmul.f32.gmra.mxu0 %v1258
    %v1491 = vpop.f32.mrf.mxu0
    %v1492 = vadd.f32 0.0, %v1491
    %1493 = vmatmul.f32.gmra.mxu0 %v1261
    %v1494 = vpop.f32.mrf.mxu0
    %v1495 = vadd.f32 0.0, %v1494
    %1496 = vmatmul.f32.gmra.mxu0 %v1264
    %v1497 = vpop.f32.mrf.mxu0
    %v1498 = vadd.f32 0.0, %v1497
    %1499 = vmatmul.f32.gmra.mxu0 %v1267
    %v1500 = vpop.f32.mrf.mxu0
    %v1501 = vadd.f32 0.0, %v1500
    %1502 = vdwg.mxu0
    %vm1519 = vcmask 1043456
    %v1520 = vrot.slane %v1391, 4
    %v1521 = vrot.slane %v1456, 4
    %v1522 = vrot.slane %v1394, 4
    %v1523 = vsel %vm1519, %v1520, %v1522
    %v1524 = vrot.slane %v1459, 4
    %v1525 = vsel %vm1519, %v1521, %v1524
    %v1526 = vrot.slane %v1397, 4
    %v1527 = vsel %vm1519, %v1522, %v1526
    %v1528 = vrot.slane %v1462, 4
    %v1529 = vsel %vm1519, %v1524, %v1528
    %v1530 = vrot.slane %v1400, 4
    %v1531 = vsel %vm1519, %v1526, %v1530
    %v1532 = vrot.slane %v1465, 4
    %v1533 = vsel %vm1519, %v1528, %v1532
    %v1534 = vrot.slane %v1403, 4
    %v1535 = vsel %vm1519, %v1530, %v1534
    %v1536 = vrot.slane %v1468, 4
    %v1537 = vsel %vm1519, %v1532, %v1536
    %v1538 = vrot.slane %v1406, 4
    %v1539 = vsel %vm1519, %v1534, %v1538
    %v1540 = vrot.slane %v1471, 4
    %v1541 = vsel %vm1519, %v1536, %v1540
    %v1542 = vrot.slane %v1409, 4
    %v1543 = vsel %vm1519, %v1538, %v1542
    %v1544 = vrot.slane %v1474, 4
    %v1545 = vsel %vm1519, %v1540, %v1544
    %v1546 = vrot.slane %v1412, 4
    %v1547 = vsel %vm1519, %v1542, %v1546
    %v1548 = vrot.slane %v1477, 4
    %v1549 = vsel %vm1519, %v1544, %v1548
    %1568 = vst [vmem:[%s5] sm:$0xf0] %v1520
    %1569 = vst [vmem:[%s5 + $0x8] sm:$0xf0] %v1521
    %1570 = vst [vmem:[%s5 + $0x10] sm:$0xff] %v1523
    %1571 = vst [vmem:[%s5 + $0x18] sm:$0xff] %v1525
    %1572 = vst [vmem:[%s5 + $0x20] sm:$0xff] %v1527
    %1573 = vst [vmem:[%s5 + $0x28] sm:$0xff] %v1529
    %1574 = vst [vmem:[%s5 + $0x30] sm:$0xff] %v1531
    %1575 = vst [vmem:[%s5 + $0x38] sm:$0xff] %v1533
    %1576 = vst [vmem:[%s5 + $0x40] sm:$0xff] %v1535
    %1577 = vst [vmem:[%s5 + $0x48] sm:$0xff] %v1537
    %1578 = vst [vmem:[%s5 + $0x50] sm:$0xff] %v1539
    %1579 = vst [vmem:[%s5 + $0x58] sm:$0xff] %v1541
    %1580 = vst [vmem:[%s5 + $0x60] sm:$0xff] %v1543
    %1581 = vst [vmem:[%s5 + $0x68] sm:$0xff] %v1545
    %1582 = vst [vmem:[%s5 + $0x70] sm:$0xff] %v1547
    %1583 = vst [vmem:[%s5 + $0x78] sm:$0xff] %v1549
    %1584 = vst [vmem:[%s5 + $0x80] sm:$0xf] %v1546
    %1585 = vst [vmem:[%s5 + $0x88] sm:$0xf] %v1548
    %v1602 = vrot.slane %v1415, 4
    %v1603 = vrot.slane %v1480, 4
    %v1604 = vrot.slane %v1418, 4
    %v1605 = vsel %vm1519, %v1602, %v1604
    %v1606 = vrot.slane %v1483, 4
    %v1607 = vsel %vm1519, %v1603, %v1606
    %v1608 = vrot.slane %v1421, 4
    %v1609 = vsel %vm1519, %v1604, %v1608
    %v1610 = vrot.slane %v1486, 4
    %v1611 = vsel %vm1519, %v1606, %v1610
    %v1612 = vrot.slane %v1424, 4
    %v1613 = vsel %vm1519, %v1608, %v1612
    %v1614 = vrot.slane %v1489, 4
    %v1615 = vsel %vm1519, %v1610, %v1614
    %v1616 = vrot.slane %v1427, 4
    %v1617 = vsel %vm1519, %v1612, %v1616
    %v1618 = vrot.slane %v1492, 4
    %v1619 = vsel %vm1519, %v1614, %v1618
    %v1620 = vrot.slane %v1430, 4
    %v1621 = vsel %vm1519, %v1616, %v1620
    %v1622 = vrot.slane %v1495, 4
    %v1623 = vsel %vm1519, %v1618, %v1622
    %v1624 = vrot.slane %v1433, 4
    %v1625 = vsel %vm1519, %v1620, %v1624
    %v1626 = vrot.slane %v1498, 4
    %v1627 = vsel %vm1519, %v1622, %v1626
    %v1628 = vrot.slane %v1436, 4
    %v1629 = vsel %vm1519, %v1624, %v1628
    %v1630 = vrot.slane %v1501, 4
    %v1631 = vsel %vm1519, %v1626, %v1630
    %1650 = vst [vmem:[%s89] sm:$0xf0] %v1602
    %1651 = vst [vmem:[%s89 + $0x8] sm:$0xf0] %v1603
    %1652 = vst [vmem:[%s89 + $0x10] sm:$0xff] %v1605
    %1653 = vst [vmem:[%s89 + $0x18] sm:$0xff] %v1607
    %1654 = vst [vmem:[%s89 + $0x20] sm:$0xff] %v1609
    %1655 = vst [vmem:[%s89 + $0x28] sm:$0xff] %v1611
    %1656 = vst [vmem:[%s89 + $0x30] sm:$0xff] %v1613
    %1657 = vst [vmem:[%s89 + $0x38] sm:$0xff] %v1615
    %1658 = vst [vmem:[%s89 + $0x40] sm:$0xff] %v1617
    %1659 = vst [vmem:[%s89 + $0x48] sm:$0xff] %v1619
    %1660 = vst [vmem:[%s89 + $0x50] sm:$0xff] %v1621
    %1661 = vst [vmem:[%s89 + $0x58] sm:$0xff] %v1623
    %1662 = vst [vmem:[%s89 + $0x60] sm:$0xff] %v1625
    %1663 = vst [vmem:[%s89 + $0x68] sm:$0xff] %v1627
    %1664 = vst [vmem:[%s89 + $0x70] sm:$0xff] %v1629
    %1665 = vst [vmem:[%s89 + $0x78] sm:$0xff] %v1631
    %1666 = vst [vmem:[%s89 + $0x80] sm:$0xf] %v1628
    %1667 = vst [vmem:[%s89 + $0x88] sm:$0xf] %v1630
    %s1668 = scalar_lea.vmem [#allocation6], 256
    %v1669 = vld [vmem:[%s1668] sm:$0xff]
    %v1670 = vld [vmem:[%s1668 + $0x8] sm:$0xff]
    %v1671 = vld [vmem:[%s1668 + $0x10] sm:$0xff]
    %v1672 = vld [vmem:[%s1668 + $0x18] sm:$0xff]
    %v1673 = vld [vmem:[%s1668 + $0x20] sm:$0xff]
    %v1674 = vld [vmem:[%s1668 + $0x28] sm:$0xff]
    %v1675 = vld [vmem:[%s1668 + $0x30] sm:$0xff]
    %v1676 = vld [vmem:[%s1668 + $0x38] sm:$0xff]
    %v1677 = vld [vmem:[%s1668 + $0x40] sm:$0xff]
    %v1678 = vld [vmem:[%s1668 + $0x48] sm:$0xff]
    %v1679 = vld [vmem:[%s1668 + $0x50] sm:$0xff]
    %v1680 = vld [vmem:[%s1668 + $0x58] sm:$0xff]
    %v1681 = vld [vmem:[%s1668 + $0x60] sm:$0xff]
    %v1682 = vld [vmem:[%s1668 + $0x68] sm:$0xff]
    %v1683 = vld [vmem:[%s1668 + $0x70] sm:$0xff]
    %v1684 = vld [vmem:[%s1668 + $0x78] sm:$0xff]
    %v1685 = vld [vmem:[%s1668 + $0x80] sm:$0xff]
    %v1686 = vld [vmem:[%s1668 + $0x88] sm:$0xff]
    %v1687 = vld [vmem:[%s1668 + $0x90] sm:$0xff]
    %v1688 = vld [vmem:[%s1668 + $0x98] sm:$0xff]
    %v1689 = vld [vmem:[%s1668 + $0xa0] sm:$0xff]
    %v1690 = vld [vmem:[%s1668 + $0xa8] sm:$0xff]
    %v1691 = vld [vmem:[%s1668 + $0xb0] sm:$0xff]
    %v1692 = vld [vmem:[%s1668 + $0xb8] sm:$0xff]
    %v1693 = vld [vmem:[%s1668 + $0xc0] sm:$0xff]
    %v1694 = vld [vmem:[%s1668 + $0xc8] sm:$0xff]
    %v1695 = vld [vmem:[%s1668 + $0xd0] sm:$0xff]
    %v1696 = vld [vmem:[%s1668 + $0xd8] sm:$0xff]
    %v1697 = vld [vmem:[%s1668 + $0xe0] sm:$0xff]
    %v1698 = vld [vmem:[%s1668 + $0xe8] sm:$0xff]
    %v1699 = vld [vmem:[%s1668 + $0xf0] sm:$0xff]
    %v1700 = vld [vmem:[%s1668 + $0xf8] sm:$0xff]
    %1701 = vmatpush.msra.mxu0 %v1699
    %1702 = vmatpush.msra.mxu0 %v1697
    %1703 = vmatpush.msra.mxu0 %v1695
    %1704 = vmatpush.msra.mxu0 %v1693
    %1705 = vmatpush.msra.mxu0 %v1691
    %1706 = vmatpush.msra.mxu0 %v1689
    %1707 = vmatpush.msra.mxu0 %v1687
    %1708 = vmatpush.msra.mxu0 %v1685
    %1709 = vmatpush.msra.mxu0 %v1683
    %1710 = vmatpush.msra.mxu0 %v1681
    %1711 = vmatpush.msra.mxu0 %v1679
    %1712 = vmatpush.msra.mxu0 %v1677
    %1713 = vmatpush.msra.mxu0 %v1675
    %1714 = vmatpush.msra.mxu0 %v1673
    %1715 = vmatpush.msra.mxu0 %v1671
    %1716 = vmatpush.msra.mxu0 %v1669
    %1717 = vmatmul.f32.gmra.mxu0 %v1157
    %v1718 = vpop.f32.mrf.mxu0
    %v1719 = vadd.f32 0.0, %v1718
    %1720 = vmatmul.f32.gmra.mxu0 %v1160
    %v1721 = vpop.f32.mrf.mxu0
    %v1722 = vadd.f32 0.0, %v1721
    %1723 = vmatmul.f32.gmra.mxu0 %v1163
    %v1724 = vpop.f32.mrf.mxu0
    %v1725 = vadd.f32 0.0, %v1724
    %1726 = vmatmul.f32.gmra.mxu0 %v1166
    %v1727 = vpop.f32.mrf.mxu0
    %v1728 = vadd.f32 0.0, %v1727
    %1729 = vmatmul.f32.gmra.mxu0 %v1169
    %v1730 = vpop.f32.mrf.mxu0
    %v1731 = vadd.f32 0.0, %v1730
    %1732 = vmatmul.f32.gmra.mxu0 %v1172
    %v1733 = vpop.f32.mrf.mxu0
    %v1734 = vadd.f32 0.0, %v1733
    %1735 = vmatmul.f32.gmra.mxu0 %v1175
    %v1736 = vpop.f32.mrf.mxu0
    %v1737 = vadd.f32 0.0, %v1736
    %1738 = vmatmul.f32.gmra.mxu0 %v1178
    %v1739 = vpop.f32.mrf.mxu0
    %v1740 = vadd.f32 0.0, %v1739
    %1741 = vmatmul.f32.gmra.mxu0 %v1270
    %v1742 = vpop.f32.mrf.mxu0
    %v1743 = vadd.f32 0.0, %v1742
    %1744 = vmatmul.f32.gmra.mxu0 %v1273
    %v1745 = vpop.f32.mrf.mxu0
    %v1746 = vadd.f32 0.0, %v1745
    %1747 = vmatmul.f32.gmra.mxu0 %v1276
    %v1748 = vpop.f32.mrf.mxu0
    %v1749 = vadd.f32 0.0, %v1748
    %1750 = vmatmul.f32.gmra.mxu0 %v1279
    %v1751 = vpop.f32.mrf.mxu0
    %v1752 = vadd.f32 0.0, %v1751
    %1753 = vmatmul.f32.gmra.mxu0 %v1282
    %v1754 = vpop.f32.mrf.mxu0
    %v1755 = vadd.f32 0.0, %v1754
    %1756 = vmatmul.f32.gmra.mxu0 %v1285
    %v1757 = vpop.f32.mrf.mxu0
    %v1758 = vadd.f32 0.0, %v1757
    %1759 = vmatmul.f32.gmra.mxu0 %v1288
    %v1760 = vpop.f32.mrf.mxu0
    %v1761 = vadd.f32 0.0, %v1760
    %1762 = vmatmul.f32.gmra.mxu0 %v1291
    %v1763 = vpop.f32.mrf.mxu0
    %v1764 = vadd.f32 0.0, %v1763
    %1765 = vdwg.mxu0
    %1766 = vmatpush.msra.mxu0 %v1700
    %1767 = vmatpush.msra.mxu0 %v1698
    %1768 = vmatpush.msra.mxu0 %v1696
    %1769 = vmatpush.msra.mxu0 %v1694
    %1770 = vmatpush.msra.mxu0 %v1692
    %1771 = vmatpush.msra.mxu0 %v1690
    %1772 = vmatpush.msra.mxu0 %v1688
    %1773 = vmatpush.msra.mxu0 %v1686
    %1774 = vmatpush.msra.mxu0 %v1684
    %1775 = vmatpush.msra.mxu0 %v1682
    %1776 = vmatpush.msra.mxu0 %v1680
    %1777 = vmatpush.msra.mxu0 %v1678
    %1778 = vmatpush.msra.mxu0 %v1676
    %1779 = vmatpush.msra.mxu0 %v1674
    %1780 = vmatpush.msra.mxu0 %v1672
    %1781 = vmatpush.msra.mxu0 %v1670
    %1782 = vmatmul.f32.gmra.mxu0 %v1157
    %v1783 = vpop.f32.mrf.mxu0
    %v1784 = vadd.f32 0.0, %v1783
    %1785 = vmatmul.f32.gmra.mxu0 %v1160
    %v1786 = vpop.f32.mrf.mxu0
    %v1787 = vadd.f32 0.0, %v1786
    %1788 = vmatmul.f32.gmra.mxu0 %v1163
    %v1789 = vpop.f32.mrf.mxu0
    %v1790 = vadd.f32 0.0, %v1789
    %1791 = vmatmul.f32.gmra.mxu0 %v1166
    %v1792 = vpop.f32.mrf.mxu0
    %v1793 = vadd.f32 0.0, %v1792
    %1794 = vmatmul.f32.gmra.mxu0 %v1169
    %v1795 = vpop.f32.mrf.mxu0
    %v1796 = vadd.f32 0.0, %v1795
    %1797 = vmatmul.f32.gmra.mxu0 %v1172
    %v1798 = vpop.f32.mrf.mxu0
    %v1799 = vadd.f32 0.0, %v1798
    %1800 = vmatmul.f32.gmra.mxu0 %v1175
    %v1801 = vpop.f32.mrf.mxu0
    %v1802 = vadd.f32 0.0, %v1801
    %1803 = vmatmul.f32.gmra.mxu0 %v1178
    %v1804 = vpop.f32.mrf.mxu0
    %v1805 = vadd.f32 0.0, %v1804
    %1806 = vmatmul.f32.gmra.mxu0 %v1270
    %v1807 = vpop.f32.mrf.mxu0
    %v1808 = vadd.f32 0.0, %v1807
    %1809 = vmatmul.f32.gmra.mxu0 %v1273
    %v1810 = vpop.f32.mrf.mxu0
    %v1811 = vadd.f32 0.0, %v1810
    %1812 = vmatmul.f32.gmra.mxu0 %v1276
    %v1813 = vpop.f32.mrf.mxu0
    %v1814 = vadd.f32 0.0, %v1813
    %1815 = vmatmul.f32.gmra.mxu0 %v1279
    %v1816 = vpop.f32.mrf.mxu0
    %v1817 = vadd.f32 0.0, %v1816
    %1818 = vmatmul.f32.gmra.mxu0 %v1282
    %v1819 = vpop.f32.mrf.mxu0
    %v1820 = vadd.f32 0.0, %v1819
    %1821 = vmatmul.f32.gmra.mxu0 %v1285
    %v1822 = vpop.f32.mrf.mxu0
    %v1823 = vadd.f32 0.0, %v1822
    %1824 = vmatmul.f32.gmra.mxu0 %v1288
    %v1825 = vpop.f32.mrf.mxu0
    %v1826 = vadd.f32 0.0, %v1825
    %1827 = vmatmul.f32.gmra.mxu0 %v1291
    %v1828 = vpop.f32.mrf.mxu0
    %v1829 = vadd.f32 0.0, %v1828
    %1830 = vdwg.mxu0
    %v1847 = vrot.slane %v1719, 4
    %v1848 = vrot.slane %v1784, 4
    %v1849 = vrot.slane %v1722, 4
    %v1850 = vsel %vm1519, %v1847, %v1849
    %v1851 = vrot.slane %v1787, 4
    %v1852 = vsel %vm1519, %v1848, %v1851
    %v1853 = vrot.slane %v1725, 4
    %v1854 = vsel %vm1519, %v1849, %v1853
    %v1855 = vrot.slane %v1790, 4
    %v1856 = vsel %vm1519, %v1851, %v1855
    %v1857 = vrot.slane %v1728, 4
    %v1858 = vsel %vm1519, %v1853, %v1857
    %v1859 = vrot.slane %v1793, 4
    %v1860 = vsel %vm1519, %v1855, %v1859
    %v1861 = vrot.slane %v1731, 4
    %v1862 = vsel %vm1519, %v1857, %v1861
    %v1863 = vrot.slane %v1796, 4
    %v1864 = vsel %vm1519, %v1859, %v1863
    %v1865 = vrot.slane %v1734, 4
    %v1866 = vsel %vm1519, %v1861, %v1865
    %v1867 = vrot.slane %v1799, 4
    %v1868 = vsel %vm1519, %v1863, %v1867
    %v1869 = vrot.slane %v1737, 4
    %v1870 = vsel %vm1519, %v1865, %v1869
    %v1871 = vrot.slane %v1802, 4
    %v1872 = vsel %vm1519, %v1867, %v1871
    %v1873 = vrot.slane %v1740, 4
    %v1874 = vsel %vm1519, %v1869, %v1873
    %v1875 = vrot.slane %v1805, 4
    %v1876 = vsel %vm1519, %v1871, %v1875
    %1895 = vst [vmem:[%s5 + $0x80] sm:$0xf0] %v1847
    %1896 = vst [vmem:[%s5 + $0x88] sm:$0xf0] %v1848
    %1897 = vst [vmem:[%s5 + $0x90] sm:$0xff] %v1850
    %1898 = vst [vmem:[%s5 + $0x98] sm:$0xff] %v1852
    %1899 = vst [vmem:[%s5 + $0xa0] sm:$0xff] %v1854
    %1900 = vst [vmem:[%s5 + $0xa8] sm:$0xff] %v1856
    %1901 = vst [vmem:[%s5 + $0xb0] sm:$0xff] %v1858
    %1902 = vst [vmem:[%s5 + $0xb8] sm:$0xff] %v1860
    %1903 = vst [vmem:[%s5 + $0xc0] sm:$0xff] %v1862
    %1904 = vst [vmem:[%s5 + $0xc8] sm:$0xff] %v1864
    %1905 = vst [vmem:[%s5 + $0xd0] sm:$0xff] %v1866
    %1906 = vst [vmem:[%s5 + $0xd8] sm:$0xff] %v1868
    %1907 = vst [vmem:[%s5 + $0xe0] sm:$0xff] %v1870
    %1908 = vst [vmem:[%s5 + $0xe8] sm:$0xff] %v1872
    %1909 = vst [vmem:[%s5 + $0xf0] sm:$0xff] %v1874
    %1910 = vst [vmem:[%s5 + $0xf8] sm:$0xff] %v1876
    %1911 = vst [vmem:[%s5 + $0x100] sm:$0xf] %v1873
    %1912 = vst [vmem:[%s5 + $0x108] sm:$0xf] %v1875
    %v1929 = vrot.slane %v1743, 4
    %v1930 = vrot.slane %v1808, 4
    %v1931 = vrot.slane %v1746, 4
    %v1932 = vsel %vm1519, %v1929, %v1931
    %v1933 = vrot.slane %v1811, 4
    %v1934 = vsel %vm1519, %v1930, %v1933
    %v1935 = vrot.slane %v1749, 4
    %v1936 = vsel %vm1519, %v1931, %v1935
    %v1937 = vrot.slane %v1814, 4
    %v1938 = vsel %vm1519, %v1933, %v1937
    %v1939 = vrot.slane %v1752, 4
    %v1940 = vsel %vm1519, %v1935, %v1939
    %v1941 = vrot.slane %v1817, 4
    %v1942 = vsel %vm1519, %v1937, %v1941
    %v1943 = vrot.slane %v1755, 4
    %v1944 = vsel %vm1519, %v1939, %v1943
    %v1945 = vrot.slane %v1820, 4
    %v1946 = vsel %vm1519, %v1941, %v1945
    %v1947 = vrot.slane %v1758, 4
    %v1948 = vsel %vm1519, %v1943, %v1947
    %v1949 = vrot.slane %v1823, 4
    %v1950 = vsel %vm1519, %v1945, %v1949
    %v1951 = vrot.slane %v1761, 4
    %v1952 = vsel %vm1519, %v1947, %v1951
    %v1953 = vrot.slane %v1826, 4
    %v1954 = vsel %vm1519, %v1949, %v1953
    %v1955 = vrot.slane %v1764, 4
    %v1956 = vsel %vm1519, %v1951, %v1955
    %v1957 = vrot.slane %v1829, 4
    %v1958 = vsel %vm1519, %v1953, %v1957
    %1977 = vst [vmem:[%s89 + $0x80] sm:$0xf0] %v1929
    %1978 = vst [vmem:[%s89 + $0x88] sm:$0xf0] %v1930
    %1979 = vst [vmem:[%s89 + $0x90] sm:$0xff] %v1932
    %1980 = vst [vmem:[%s89 + $0x98] sm:$0xff] %v1934
    %1981 = vst [vmem:[%s89 + $0xa0] sm:$0xff] %v1936
    %1982 = vst [vmem:[%s89 + $0xa8] sm:$0xff] %v1938
    %1983 = vst [vmem:[%s89 + $0xb0] sm:$0xff] %v1940
    %1984 = vst [vmem:[%s89 + $0xb8] sm:$0xff] %v1942
    %1985 = vst [vmem:[%s89 + $0xc0] sm:$0xff] %v1944
    %1986 = vst [vmem:[%s89 + $0xc8] sm:$0xff] %v1946
    %1987 = vst [vmem:[%s89 + $0xd0] sm:$0xff] %v1948
    %1988 = vst [vmem:[%s89 + $0xd8] sm:$0xff] %v1950
    %1989 = vst [vmem:[%s89 + $0xe0] sm:$0xff] %v1952
    %1990 = vst [vmem:[%s89 + $0xe8] sm:$0xff] %v1954
    %1991 = vst [vmem:[%s89 + $0xf0] sm:$0xff] %v1956
    %1992 = vst [vmem:[%s89 + $0xf8] sm:$0xff] %v1958
    %1993 = vst [vmem:[%s89 + $0x100] sm:$0xf] %v1955
    %1994 = vst [vmem:[%s89 + $0x108] sm:$0xf] %v1957
    %s1995 = scalar_lea.vmem [#allocation6], 512
    %v1996 = vld [vmem:[%s1995] sm:$0xff]
    %v1997 = vld [vmem:[%s1995 + $0x8] sm:$0xff]
    %v1998 = vld [vmem:[%s1995 + $0x10] sm:$0xff]
    %v1999 = vld [vmem:[%s1995 + $0x18] sm:$0xff]
    %v2000 = vld [vmem:[%s1995 + $0x20] sm:$0xff]
    %v2001 = vld [vmem:[%s1995 + $0x28] sm:$0xff]
    %v2002 = vld [vmem:[%s1995 + $0x30] sm:$0xff]
    %v2003 = vld [vmem:[%s1995 + $0x38] sm:$0xff]
    %v2004 = vld [vmem:[%s1995 + $0x40] sm:$0xff]
    %v2005 = vld [vmem:[%s1995 + $0x48] sm:$0xff]
    %v2006 = vld [vmem:[%s1995 + $0x50] sm:$0xff]
    %v2007 = vld [vmem:[%s1995 + $0x58] sm:$0xff]
    %v2008 = vld [vmem:[%s1995 + $0x60] sm:$0xff]
    %v2009 = vld [vmem:[%s1995 + $0x68] sm:$0xff]
    %v2010 = vld [vmem:[%s1995 + $0x70] sm:$0xff]
    %v2011 = vld [vmem:[%s1995 + $0x78] sm:$0xff]
    %v2012 = vld [vmem:[%s1995 + $0x80] sm:$0xff]
    %v2013 = vld [vmem:[%s1995 + $0x88] sm:$0xff]
    %v2014 = vld [vmem:[%s1995 + $0x90] sm:$0xff]
    %v2015 = vld [vmem:[%s1995 + $0x98] sm:$0xff]
    %v2016 = vld [vmem:[%s1995 + $0xa0] sm:$0xff]
    %v2017 = vld [vmem:[%s1995 + $0xa8] sm:$0xff]
    %v2018 = vld [vmem:[%s1995 + $0xb0] sm:$0xff]
    %v2019 = vld [vmem:[%s1995 + $0xb8] sm:$0xff]
    %v2020 = vld [vmem:[%s1995 + $0xc0] sm:$0xff]
    %v2021 = vld [vmem:[%s1995 + $0xc8] sm:$0xff]
    %v2022 = vld [vmem:[%s1995 + $0xd0] sm:$0xff]
    %v2023 = vld [vmem:[%s1995 + $0xd8] sm:$0xff]
    %v2024 = vld [vmem:[%s1995 + $0xe0] sm:$0xff]
    %v2025 = vld [vmem:[%s1995 + $0xe8] sm:$0xff]
    %v2026 = vld [vmem:[%s1995 + $0xf0] sm:$0xff]
    %v2027 = vld [vmem:[%s1995 + $0xf8] sm:$0xff]
    %2028 = vmatpush.msra.mxu0 %v2026
    %2029 = vmatpush.msra.mxu0 %v2024
    %2030 = vmatpush.msra.mxu0 %v2022
    %2031 = vmatpush.msra.mxu0 %v2020
    %2032 = vmatpush.msra.mxu0 %v2018
    %2033 = vmatpush.msra.mxu0 %v2016
    %2034 = vmatpush.msra.mxu0 %v2014
    %2035 = vmatpush.msra.mxu0 %v2012
    %2036 = vmatpush.msra.mxu0 %v2010
    %2037 = vmatpush.msra.mxu0 %v2008
    %2038 = vmatpush.msra.mxu0 %v2006
    %2039 = vmatpush.msra.mxu0 %v2004
    %2040 = vmatpush.msra.mxu0 %v2002
    %2041 = vmatpush.msra.mxu0 %v2000
    %2042 = vmatpush.msra.mxu0 %v1998
    %2043 = vmatpush.msra.mxu0 %v1996
    %2044 = vmatmul.f32.gmra.mxu0 %v1181
    %v2045 = vpop.f32.mrf.mxu0
    %v2046 = vadd.f32 0.0, %v2045
    %2047 = vmatmul.f32.gmra.mxu0 %v1184
    %v2048 = vpop.f32.mrf.mxu0
    %v2049 = vadd.f32 0.0, %v2048
    %2050 = vmatmul.f32.gmra.mxu0 %v1187
    %v2051 = vpop.f32.mrf.mxu0
    %v2052 = vadd.f32 0.0, %v2051
    %2053 = vmatmul.f32.gmra.mxu0 %v1190
    %v2054 = vpop.f32.mrf.mxu0
    %v2055 = vadd.f32 0.0, %v2054
    %2056 = vmatmul.f32.gmra.mxu0 %v1193
    %v2057 = vpop.f32.mrf.mxu0
    %v2058 = vadd.f32 0.0, %v2057
    %2059 = vmatmul.f32.gmra.mxu0 %v1196
    %v2060 = vpop.f32.mrf.mxu0
    %v2061 = vadd.f32 0.0, %v2060
    %2062 = vmatmul.f32.gmra.mxu0 %v1199
    %v2063 = vpop.f32.mrf.mxu0
    %v2064 = vadd.f32 0.0, %v2063
    %2065 = vmatmul.f32.gmra.mxu0 %v1202
    %v2066 = vpop.f32.mrf.mxu0
    %v2067 = vadd.f32 0.0, %v2066
    %2068 = vmatmul.f32.gmra.mxu0 %v1294
    %v2069 = vpop.f32.mrf.mxu0
    %v2070 = vadd.f32 0.0, %v2069
    %2071 = vmatmul.f32.gmra.mxu0 %v1297
    %v2072 = vpop.f32.mrf.mxu0
    %v2073 = vadd.f32 0.0, %v2072
    %2074 = vmatmul.f32.gmra.mxu0 %v1300
    %v2075 = vpop.f32.mrf.mxu0
    %v2076 = vadd.f32 0.0, %v2075
    %2077 = vmatmul.f32.gmra.mxu0 %v1303
    %v2078 = vpop.f32.mrf.mxu0
    %v2079 = vadd.f32 0.0, %v2078
    %2080 = vmatmul.f32.gmra.mxu0 %v1306
    %v2081 = vpop.f32.mrf.mxu0
    %v2082 = vadd.f32 0.0, %v2081
    %2083 = vmatmul.f32.gmra.mxu0 %v1309
    %v2084 = vpop.f32.mrf.mxu0
    %v2085 = vadd.f32 0.0, %v2084
    %2086 = vmatmul.f32.gmra.mxu0 %v1312
    %v2087 = vpop.f32.mrf.mxu0
    %v2088 = vadd.f32 0.0, %v2087
    %2089 = vmatmul.f32.gmra.mxu0 %v1315
    %v2090 = vpop.f32.mrf.mxu0
    %v2091 = vadd.f32 0.0, %v2090
    %2092 = vdwg.mxu0
    %2093 = vmatpush.msra.mxu0 %v2027
    %2094 = vmatpush.msra.mxu0 %v2025
    %2095 = vmatpush.msra.mxu0 %v2023
    %2096 = vmatpush.msra.mxu0 %v2021
    %2097 = vmatpush.msra.mxu0 %v2019
    %2098 = vmatpush.msra.mxu0 %v2017
    %2099 = vmatpush.msra.mxu0 %v2015
    %2100 = vmatpush.msra.mxu0 %v2013
    %2101 = vmatpush.msra.mxu0 %v2011
    %2102 = vmatpush.msra.mxu0 %v2009
    %2103 = vmatpush.msra.mxu0 %v2007
    %2104 = vmatpush.msra.mxu0 %v2005
    %2105 = vmatpush.msra.mxu0 %v2003
    %2106 = vmatpush.msra.mxu0 %v2001
    %2107 = vmatpush.msra.mxu0 %v1999
    %2108 = vmatpush.msra.mxu0 %v1997
    %2109 = vmatmul.f32.gmra.mxu0 %v1181
    %v2110 = vpop.f32.mrf.mxu0
    %v2111 = vadd.f32 0.0, %v2110
    %2112 = vmatmul.f32.gmra.mxu0 %v1184
    %v2113 = vpop.f32.mrf.mxu0
    %v2114 = vadd.f32 0.0, %v2113
    %2115 = vmatmul.f32.gmra.mxu0 %v1187
    %v2116 = vpop.f32.mrf.mxu0
    %v2117 = vadd.f32 0.0, %v2116
    %2118 = vmatmul.f32.gmra.mxu0 %v1190
    %v2119 = vpop.f32.mrf.mxu0
    %v2120 = vadd.f32 0.0, %v2119
    %2121 = vmatmul.f32.gmra.mxu0 %v1193
    %v2122 = vpop.f32.mrf.mxu0
    %v2123 = vadd.f32 0.0, %v2122
    %2124 = vmatmul.f32.gmra.mxu0 %v1196
    %v2125 = vpop.f32.mrf.mxu0
    %v2126 = vadd.f32 0.0, %v2125
    %2127 = vmatmul.f32.gmra.mxu0 %v1199
    %v2128 = vpop.f32.mrf.mxu0
    %v2129 = vadd.f32 0.0, %v2128
    %2130 = vmatmul.f32.gmra.mxu0 %v1202
    %v2131 = vpop.f32.mrf.mxu0
    %v2132 = vadd.f32 0.0, %v2131
    %2133 = vmatmul.f32.gmra.mxu0 %v1294
    %v2134 = vpop.f32.mrf.mxu0
    %v2135 = vadd.f32 0.0, %v2134
    %2136 = vmatmul.f32.gmra.mxu0 %v1297
    %v2137 = vpop.f32.mrf.mxu0
    %v2138 = vadd.f32 0.0, %v2137
    %2139 = vmatmul.f32.gmra.mxu0 %v1300
    %v2140 = vpop.f32.mrf.mxu0
    %v2141 = vadd.f32 0.0, %v2140
    %2142 = vmatmul.f32.gmra.mxu0 %v1303
    %v2143 = vpop.f32.mrf.mxu0
    %v2144 = vadd.f32 0.0, %v2143
    %2145 = vmatmul.f32.gmra.mxu0 %v1306
    %v2146 = vpop.f32.mrf.mxu0
    %v2147 = vadd.f32 0.0, %v2146
    %2148 = vmatmul.f32.gmra.mxu0 %v1309
    %v2149 = vpop.f32.mrf.mxu0
    %v2150 = vadd.f32 0.0, %v2149
    %2151 = vmatmul.f32.gmra.mxu0 %v1312
    %v2152 = vpop.f32.mrf.mxu0
    %v2153 = vadd.f32 0.0, %v2152
    %2154 = vmatmul.f32.gmra.mxu0 %v1315
    %v2155 = vpop.f32.mrf.mxu0
    %v2156 = vadd.f32 0.0, %v2155
    %2157 = vdwg.mxu0
    %v2174 = vrot.slane %v2046, 4
    %v2175 = vrot.slane %v2111, 4
    %v2176 = vrot.slane %v2049, 4
    %v2177 = vsel %vm1519, %v2174, %v2176
    %v2178 = vrot.slane %v2114, 4
    %v2179 = vsel %vm1519, %v2175, %v2178
    %v2180 = vrot.slane %v2052, 4
    %v2181 = vsel %vm1519, %v2176, %v2180
    %v2182 = vrot.slane %v2117, 4
    %v2183 = vsel %vm1519, %v2178, %v2182
    %v2184 = vrot.slane %v2055, 4
    %v2185 = vsel %vm1519, %v2180, %v2184
    %v2186 = vrot.slane %v2120, 4
    %v2187 = vsel %vm1519, %v2182, %v2186
    %v2188 = vrot.slane %v2058, 4
    %v2189 = vsel %vm1519, %v2184, %v2188
    %v2190 = vrot.slane %v2123, 4
    %v2191 = vsel %vm1519, %v2186, %v2190
    %v2192 = vrot.slane %v2061, 4
    %v2193 = vsel %vm1519, %v2188, %v2192
    %v2194 = vrot.slane %v2126, 4
    %v2195 = vsel %vm1519, %v2190, %v2194
    %v2196 = vrot.slane %v2064, 4
    %v2197 = vsel %vm1519, %v2192, %v2196
    %v2198 = vrot.slane %v2129, 4
    %v2199 = vsel %vm1519, %v2194, %v2198
    %v2200 = vrot.slane %v2067, 4
    %v2201 = vsel %vm1519, %v2196, %v2200
    %v2202 = vrot.slane %v2132, 4
    %v2203 = vsel %vm1519, %v2198, %v2202
    %2222 = vst [vmem:[%s5 + $0x100] sm:$0xf0] %v2174
    %2223 = vst [vmem:[%s5 + $0x108] sm:$0xf0] %v2175
    %2224 = vst [vmem:[%s5 + $0x110] sm:$0xff] %v2177
    %2225 = vst [vmem:[%s5 + $0x118] sm:$0xff] %v2179
    %2226 = vst [vmem:[%s5 + $0x120] sm:$0xff] %v2181
    %2227 = vst [vmem:[%s5 + $0x128] sm:$0xff] %v2183
    %2228 = vst [vmem:[%s5 + $0x130] sm:$0xff] %v2185
    %2229 = vst [vmem:[%s5 + $0x138] sm:$0xff] %v2187
    %2230 = vst [vmem:[%s5 + $0x140] sm:$0xff] %v2189
    %2231 = vst [vmem:[%s5 + $0x148] sm:$0xff] %v2191
    %2232 = vst [vmem:[%s5 + $0x150] sm:$0xff] %v2193
    %2233 = vst [vmem:[%s5 + $0x158] sm:$0xff] %v2195
    %2234 = vst [vmem:[%s5 + $0x160] sm:$0xff] %v2197
    %2235 = vst [vmem:[%s5 + $0x168] sm:$0xff] %v2199
    %2236 = vst [vmem:[%s5 + $0x170] sm:$0xff] %v2201
    %2237 = vst [vmem:[%s5 + $0x178] sm:$0xff] %v2203
    %2238 = vst [vmem:[%s5 + $0x180] sm:$0xf] %v2200
    %2239 = vst [vmem:[%s5 + $0x188] sm:$0xf] %v2202
    %v2256 = vrot.slane %v2070, 4
    %v2257 = vrot.slane %v2135, 4
    %v2258 = vrot.slane %v2073, 4
    %v2259 = vsel %vm1519, %v2256, %v2258
    %v2260 = vrot.slane %v2138, 4
    %v2261 = vsel %vm1519, %v2257, %v2260
    %v2262 = vrot.slane %v2076, 4
    %v2263 = vsel %vm1519, %v2258, %v2262
    %v2264 = vrot.slane %v2141, 4
    %v2265 = vsel %vm1519, %v2260, %v2264
    %v2266 = vrot.slane %v2079, 4
    %v2267 = vsel %vm1519, %v2262, %v2266
    %v2268 = vrot.slane %v2144, 4
    %v2269 = vsel %vm1519, %v2264, %v2268
    %v2270 = vrot.slane %v2082, 4
    %v2271 = vsel %vm1519, %v2266, %v2270
    %v2272 = vrot.slane %v2147, 4
    %v2273 = vsel %vm1519, %v2268, %v2272
    %v2274 = vrot.slane %v2085, 4
    %v2275 = vsel %vm1519, %v2270, %v2274
    %v2276 = vrot.slane %v2150, 4
    %v2277 = vsel %vm1519, %v2272, %v2276
    %v2278 = vrot.slane %v2088, 4
    %v2279 = vsel %vm1519, %v2274, %v2278
    %v2280 = vrot.slane %v2153, 4
    %v2281 = vsel %vm1519, %v2276, %v2280
    %v2282 = vrot.slane %v2091, 4
    %v2283 = vsel %vm1519, %v2278, %v2282
    %v2284 = vrot.slane %v2156, 4
    %v2285 = vsel %vm1519, %v2280, %v2284
    %2304 = vst [vmem:[%s89 + $0x100] sm:$0xf0] %v2256
    %2305 = vst [vmem:[%s89 + $0x108] sm:$0xf0] %v2257
    %2306 = vst [vmem:[%s89 + $0x110] sm:$0xff] %v2259
    %2307 = vst [vmem:[%s89 + $0x118] sm:$0xff] %v2261
    %2308 = vst [vmem:[%s89 + $0x120] sm:$0xff] %v2263
    %2309 = vst [vmem:[%s89 + $0x128] sm:$0xff] %v2265
    %2310 = vst [vmem:[%s89 + $0x130] sm:$0xff] %v2267
    %2311 = vst [vmem:[%s89 + $0x138] sm:$0xff] %v2269
    %2312 = vst [vmem:[%s89 + $0x140] sm:$0xff] %v2271
    %2313 = vst [vmem:[%s89 + $0x148] sm:$0xff] %v2273
    %2314 = vst [vmem:[%s89 + $0x150] sm:$0xff] %v2275
    %2315 = vst [vmem:[%s89 + $0x158] sm:$0xff] %v2277
    %2316 = vst [vmem:[%s89 + $0x160] sm:$0xff] %v2279
    %2317 = vst [vmem:[%s89 + $0x168] sm:$0xff] %v2281
    %2318 = vst [vmem:[%s89 + $0x170] sm:$0xff] %v2283
    %2319 = vst [vmem:[%s89 + $0x178] sm:$0xff] %v2285
    %2320 = vst [vmem:[%s89 + $0x180] sm:$0xf] %v2282
    %2321 = vst [vmem:[%s89 + $0x188] sm:$0xf] %v2284
    %s2322 = scalar_lea.vmem [#allocation6], 768
    %v2323 = vld [vmem:[%s2322] sm:$0xff]
    %v2324 = vld [vmem:[%s2322 + $0x8] sm:$0xff]
    %v2325 = vld [vmem:[%s2322 + $0x10] sm:$0xff]
    %v2326 = vld [vmem:[%s2322 + $0x18] sm:$0xff]
    %v2327 = vld [vmem:[%s2322 + $0x20] sm:$0xff]
    %v2328 = vld [vmem:[%s2322 + $0x28] sm:$0xff]
    %v2329 = vld [vmem:[%s2322 + $0x30] sm:$0xff]
    %v2330 = vld [vmem:[%s2322 + $0x38] sm:$0xff]
    %v2331 = vld [vmem:[%s2322 + $0x40] sm:$0xff]
    %v2332 = vld [vmem:[%s2322 + $0x48] sm:$0xff]
    %v2333 = vld [vmem:[%s2322 + $0x50] sm:$0xff]
    %v2334 = vld [vmem:[%s2322 + $0x58] sm:$0xff]
    %v2335 = vld [vmem:[%s2322 + $0x60] sm:$0xff]
    %v2336 = vld [vmem:[%s2322 + $0x68] sm:$0xff]
    %v2337 = vld [vmem:[%s2322 + $0x70] sm:$0xff]
    %v2338 = vld [vmem:[%s2322 + $0x78] sm:$0xff]
    %v2339 = vld [vmem:[%s2322 + $0x80] sm:$0xff]
    %v2340 = vld [vmem:[%s2322 + $0x88] sm:$0xff]
    %v2341 = vld [vmem:[%s2322 + $0x90] sm:$0xff]
    %v2342 = vld [vmem:[%s2322 + $0x98] sm:$0xff]
    %v2343 = vld [vmem:[%s2322 + $0xa0] sm:$0xff]
    %v2344 = vld [vmem:[%s2322 + $0xa8] sm:$0xff]
    %v2345 = vld [vmem:[%s2322 + $0xb0] sm:$0xff]
    %v2346 = vld [vmem:[%s2322 + $0xb8] sm:$0xff]
    %v2347 = vld [vmem:[%s2322 + $0xc0] sm:$0xff]
    %v2348 = vld [vmem:[%s2322 + $0xc8] sm:$0xff]
    %v2349 = vld [vmem:[%s2322 + $0xd0] sm:$0xff]
    %v2350 = vld [vmem:[%s2322 + $0xd8] sm:$0xff]
    %v2351 = vld [vmem:[%s2322 + $0xe0] sm:$0xff]
    %v2352 = vld [vmem:[%s2322 + $0xe8] sm:$0xff]
    %v2353 = vld [vmem:[%s2322 + $0xf0] sm:$0xff]
    %v2354 = vld [vmem:[%s2322 + $0xf8] sm:$0xff]
    %2355 = vmatpush.msra.mxu0 %v2353
    %2356 = vmatpush.msra.mxu0 %v2351
    %2357 = vmatpush.msra.mxu0 %v2349
    %2358 = vmatpush.msra.mxu0 %v2347
    %2359 = vmatpush.msra.mxu0 %v2345
    %2360 = vmatpush.msra.mxu0 %v2343
    %2361 = vmatpush.msra.mxu0 %v2341
    %2362 = vmatpush.msra.mxu0 %v2339
    %2363 = vmatpush.msra.mxu0 %v2337
    %2364 = vmatpush.msra.mxu0 %v2335
    %2365 = vmatpush.msra.mxu0 %v2333
    %2366 = vmatpush.msra.mxu0 %v2331
    %2367 = vmatpush.msra.mxu0 %v2329
    %2368 = vmatpush.msra.mxu0 %v2327
    %2369 = vmatpush.msra.mxu0 %v2325
    %2370 = vmatpush.msra.mxu0 %v2323
    %2371 = vmatmul.f32.gmra.mxu0 %v1205
    %v2372 = vpop.f32.mrf.mxu0
    %v2373 = vadd.f32 0.0, %v2372
    %2374 = vmatmul.f32.gmra.mxu0 %v1208
    %v2375 = vpop.f32.mrf.mxu0
    %v2376 = vadd.f32 0.0, %v2375
    %2377 = vmatmul.f32.gmra.mxu0 %v1211
    %v2378 = vpop.f32.mrf.mxu0
    %v2379 = vadd.f32 0.0, %v2378
    %2380 = vmatmul.f32.gmra.mxu0 %v1214
    %v2381 = vpop.f32.mrf.mxu0
    %v2382 = vadd.f32 0.0, %v2381
    %2383 = vmatmul.f32.gmra.mxu0 %v1217
    %v2384 = vpop.f32.mrf.mxu0
    %v2385 = vadd.f32 0.0, %v2384
    %2386 = vmatmul.f32.gmra.mxu0 %v1220
    %v2387 = vpop.f32.mrf.mxu0
    %v2388 = vadd.f32 0.0, %v2387
    %2389 = vmatmul.f32.gmra.mxu0 %v1223
    %v2390 = vpop.f32.mrf.mxu0
    %v2391 = vadd.f32 0.0, %v2390
    %2392 = vmatmul.f32.gmra.mxu0 %v1226
    %v2393 = vpop.f32.mrf.mxu0
    %v2394 = vadd.f32 0.0, %v2393
    %2395 = vmatmul.f32.gmra.mxu0 %v1318
    %v2396 = vpop.f32.mrf.mxu0
    %v2397 = vadd.f32 0.0, %v2396
    %2398 = vmatmul.f32.gmra.mxu0 %v1321
    %v2399 = vpop.f32.mrf.mxu0
    %v2400 = vadd.f32 0.0, %v2399
    %2401 = vmatmul.f32.gmra.mxu0 %v1324
    %v2402 = vpop.f32.mrf.mxu0
    %v2403 = vadd.f32 0.0, %v2402
    %2404 = vmatmul.f32.gmra.mxu0 %v1327
    %v2405 = vpop.f32.mrf.mxu0
    %v2406 = vadd.f32 0.0, %v2405
    %2407 = vmatmul.f32.gmra.mxu0 %v1330
    %v2408 = vpop.f32.mrf.mxu0
    %v2409 = vadd.f32 0.0, %v2408
    %2410 = vmatmul.f32.gmra.mxu0 %v1333
    %v2411 = vpop.f32.mrf.mxu0
    %v2412 = vadd.f32 0.0, %v2411
    %2413 = vmatmul.f32.gmra.mxu0 %v1336
    %v2414 = vpop.f32.mrf.mxu0
    %v2415 = vadd.f32 0.0, %v2414
    %2416 = vmatmul.f32.gmra.mxu0 %v1339
    %v2417 = vpop.f32.mrf.mxu0
    %v2418 = vadd.f32 0.0, %v2417
    %2419 = vdwg.mxu0
    %2420 = vmatpush.msra.mxu0 %v2354
    %2421 = vmatpush.msra.mxu0 %v2352
    %2422 = vmatpush.msra.mxu0 %v2350
    %2423 = vmatpush.msra.mxu0 %v2348
    %2424 = vmatpush.msra.mxu0 %v2346
    %2425 = vmatpush.msra.mxu0 %v2344
    %2426 = vmatpush.msra.mxu0 %v2342
    %2427 = vmatpush.msra.mxu0 %v2340
    %2428 = vmatpush.msra.mxu0 %v2338
    %2429 = vmatpush.msra.mxu0 %v2336
    %2430 = vmatpush.msra.mxu0 %v2334
    %2431 = vmatpush.msra.mxu0 %v2332
    %2432 = vmatpush.msra.mxu0 %v2330
    %2433 = vmatpush.msra.mxu0 %v2328
    %2434 = vmatpush.msra.mxu0 %v2326
    %2435 = vmatpush.msra.mxu0 %v2324
    %2436 = vmatmul.f32.gmra.mxu0 %v1205
    %v2437 = vpop.f32.mrf.mxu0
    %v2438 = vadd.f32 0.0, %v2437
    %2439 = vmatmul.f32.gmra.mxu0 %v1208
    %v2440 = vpop.f32.mrf.mxu0
    %v2441 = vadd.f32 0.0, %v2440
    %2442 = vmatmul.f32.gmra.mxu0 %v1211
    %v2443 = vpop.f32.mrf.mxu0
    %v2444 = vadd.f32 0.0, %v2443
    %2445 = vmatmul.f32.gmra.mxu0 %v1214
    %v2446 = vpop.f32.mrf.mxu0
    %v2447 = vadd.f32 0.0, %v2446
    %2448 = vmatmul.f32.gmra.mxu0 %v1217
    %v2449 = vpop.f32.mrf.mxu0
    %v2450 = vadd.f32 0.0, %v2449
    %2451 = vmatmul.f32.gmra.mxu0 %v1220
    %v2452 = vpop.f32.mrf.mxu0
    %v2453 = vadd.f32 0.0, %v2452
    %2454 = vmatmul.f32.gmra.mxu0 %v1223
    %v2455 = vpop.f32.mrf.mxu0
    %v2456 = vadd.f32 0.0, %v2455
    %2457 = vmatmul.f32.gmra.mxu0 %v1226
    %v2458 = vpop.f32.mrf.mxu0
    %v2459 = vadd.f32 0.0, %v2458
    %2460 = vmatmul.f32.gmra.mxu0 %v1318
    %v2461 = vpop.f32.mrf.mxu0
    %v2462 = vadd.f32 0.0, %v2461
    %2463 = vmatmul.f32.gmra.mxu0 %v1321
    %v2464 = vpop.f32.mrf.mxu0
    %v2465 = vadd.f32 0.0, %v2464
    %2466 = vmatmul.f32.gmra.mxu0 %v1324
    %v2467 = vpop.f32.mrf.mxu0
    %v2468 = vadd.f32 0.0, %v2467
    %2469 = vmatmul.f32.gmra.mxu0 %v1327
    %v2470 = vpop.f32.mrf.mxu0
    %v2471 = vadd.f32 0.0, %v2470
    %2472 = vmatmul.f32.gmra.mxu0 %v1330
    %v2473 = vpop.f32.mrf.mxu0
    %v2474 = vadd.f32 0.0, %v2473
    %2475 = vmatmul.f32.gmra.mxu0 %v1333
    %v2476 = vpop.f32.mrf.mxu0
    %v2477 = vadd.f32 0.0, %v2476
    %2478 = vmatmul.f32.gmra.mxu0 %v1336
    %v2479 = vpop.f32.mrf.mxu0
    %v2480 = vadd.f32 0.0, %v2479
    %2481 = vmatmul.f32.gmra.mxu0 %v1339
    %v2482 = vpop.f32.mrf.mxu0
    %v2483 = vadd.f32 0.0, %v2482
    %2484 = vdwg.mxu0
    %v2501 = vrot.slane %v2373, 4
    %v2502 = vrot.slane %v2438, 4
    %v2503 = vrot.slane %v2376, 4
    %v2504 = vsel %vm1519, %v2501, %v2503
    %v2505 = vrot.slane %v2441, 4
    %v2506 = vsel %vm1519, %v2502, %v2505
    %v2507 = vrot.slane %v2379, 4
    %v2508 = vsel %vm1519, %v2503, %v2507
    %v2509 = vrot.slane %v2444, 4
    %v2510 = vsel %vm1519, %v2505, %v2509
    %v2511 = vrot.slane %v2382, 4
    %v2512 = vsel %vm1519, %v2507, %v2511
    %v2513 = vrot.slane %v2447, 4
    %v2514 = vsel %vm1519, %v2509, %v2513
    %v2515 = vrot.slane %v2385, 4
    %v2516 = vsel %vm1519, %v2511, %v2515
    %v2517 = vrot.slane %v2450, 4
    %v2518 = vsel %vm1519, %v2513, %v2517
    %v2519 = vrot.slane %v2388, 4
    %v2520 = vsel %vm1519, %v2515, %v2519
    %v2521 = vrot.slane %v2453, 4
    %v2522 = vsel %vm1519, %v2517, %v2521
    %v2523 = vrot.slane %v2391, 4
    %v2524 = vsel %vm1519, %v2519, %v2523
    %v2525 = vrot.slane %v2456, 4
    %v2526 = vsel %vm1519, %v2521, %v2525
    %v2527 = vrot.slane %v2394, 4
    %v2528 = vsel %vm1519, %v2523, %v2527
    %v2529 = vrot.slane %v2459, 4
    %v2530 = vsel %vm1519, %v2525, %v2529
    %2549 = vst [vmem:[%s5 + $0x180] sm:$0xf0] %v2501
    %2550 = vst [vmem:[%s5 + $0x188] sm:$0xf0] %v2502
    %2551 = vst [vmem:[%s5 + $0x190] sm:$0xff] %v2504
    %2552 = vst [vmem:[%s5 + $0x198] sm:$0xff] %v2506
    %2553 = vst [vmem:[%s5 + $0x1a0] sm:$0xff] %v2508
    %2554 = vst [vmem:[%s5 + $0x1a8] sm:$0xff] %v2510
    %2555 = vst [vmem:[%s5 + $0x1b0] sm:$0xff] %v2512
    %2556 = vst [vmem:[%s5 + $0x1b8] sm:$0xff] %v2514
    %2557 = vst [vmem:[%s5 + $0x1c0] sm:$0xff] %v2516
    %2558 = vst [vmem:[%s5 + $0x1c8] sm:$0xff] %v2518
    %2559 = vst [vmem:[%s5 + $0x1d0] sm:$0xff] %v2520
    %2560 = vst [vmem:[%s5 + $0x1d8] sm:$0xff] %v2522
    %2561 = vst [vmem:[%s5 + $0x1e0] sm:$0xff] %v2524
    %2562 = vst [vmem:[%s5 + $0x1e8] sm:$0xff] %v2526
    %2563 = vst [vmem:[%s5 + $0x1f0] sm:$0xff] %v2528
    %2564 = vst [vmem:[%s5 + $0x1f8] sm:$0xff] %v2530
    %2565 = vst [vmem:[%s5 + $0x200] sm:$0xf] %v2527
    %2566 = vst [vmem:[%s5 + $0x208] sm:$0xf] %v2529
    %v2583 = vrot.slane %v2397, 4
    %v2584 = vrot.slane %v2462, 4
    %v2585 = vrot.slane %v2400, 4
    %v2586 = vsel %vm1519, %v2583, %v2585
    %v2587 = vrot.slane %v2465, 4
    %v2588 = vsel %vm1519, %v2584, %v2587
    %v2589 = vrot.slane %v2403, 4
    %v2590 = vsel %vm1519, %v2585, %v2589
    %v2591 = vrot.slane %v2468, 4
    %v2592 = vsel %vm1519, %v2587, %v2591
    %v2593 = vrot.slane %v2406, 4
    %v2594 = vsel %vm1519, %v2589, %v2593
    %v2595 = vrot.slane %v2471, 4
    %v2596 = vsel %vm1519, %v2591, %v2595
    %v2597 = vrot.slane %v2409, 4
    %v2598 = vsel %vm1519, %v2593, %v2597
    %v2599 = vrot.slane %v2474, 4
    %v2600 = vsel %vm1519, %v2595, %v2599
    %v2601 = vrot.slane %v2412, 4
    %v2602 = vsel %vm1519, %v2597, %v2601
    %v2603 = vrot.slane %v2477, 4
    %v2604 = vsel %vm1519, %v2599, %v2603
    %v2605 = vrot.slane %v2415, 4
    %v2606 = vsel %vm1519, %v2601, %v2605
    %v2607 = vrot.slane %v2480, 4
    %v2608 = vsel %vm1519, %v2603, %v2607
    %v2609 = vrot.slane %v2418, 4
    %v2610 = vsel %vm1519, %v2605, %v2609
    %v2611 = vrot.slane %v2483, 4
    %v2612 = vsel %vm1519, %v2607, %v2611
    %2631 = vst [vmem:[%s89 + $0x180] sm:$0xf0] %v2583
    %2632 = vst [vmem:[%s89 + $0x188] sm:$0xf0] %v2584
    %2633 = vst [vmem:[%s89 + $0x190] sm:$0xff] %v2586
    %2634 = vst [vmem:[%s89 + $0x198] sm:$0xff] %v2588
    %2635 = vst [vmem:[%s89 + $0x1a0] sm:$0xff] %v2590
    %2636 = vst [vmem:[%s89 + $0x1a8] sm:$0xff] %v2592
    %2637 = vst [vmem:[%s89 + $0x1b0] sm:$0xff] %v2594
    %2638 = vst [vmem:[%s89 + $0x1b8] sm:$0xff] %v2596
    %2639 = vst [vmem:[%s89 + $0x1c0] sm:$0xff] %v2598
    %2640 = vst [vmem:[%s89 + $0x1c8] sm:$0xff] %v2600
    %2641 = vst [vmem:[%s89 + $0x1d0] sm:$0xff] %v2602
    %2642 = vst [vmem:[%s89 + $0x1d8] sm:$0xff] %v2604
    %2643 = vst [vmem:[%s89 + $0x1e0] sm:$0xff] %v2606
    %2644 = vst [vmem:[%s89 + $0x1e8] sm:$0xff] %v2608
    %2645 = vst [vmem:[%s89 + $0x1f0] sm:$0xff] %v2610
    %2646 = vst [vmem:[%s89 + $0x1f8] sm:$0xff] %v2612
    %2647 = vst [vmem:[%s89 + $0x200] sm:$0xf] %v2609
    %2648 = vst [vmem:[%s89 + $0x208] sm:$0xf] %v2611
    // Predicated region
    $region38: #{a_call__.1} parent=1 // pred_check
      _
    $region39: #{a_call__.1} parent=1 // pred_check_branch
      %2650 = sbr.rel (0) target = $region41
    $region40: #{a_call__.1} parent=1 // pred_region
      _
    $region41: #{a_call__.1} parent=1 // pred_fallthru
      _
    // Predicated region
    $region42: #{a_call__.1} parent=1 // pred_check
      _
    $region43: #{a_call__.1} parent=1 // pred_check_branch
      %2652 = sbr.rel (0) target = $region45
    $region44: #{a_call__.1} parent=1 // pred_region
      _
    $region45: #{a_call__.1} parent=1 // pred_fallthru
      _
    %2653 = vsyncpa [#allocation3], 1
    %2654 = vsyncpa [#allocation5], 1
    %2655 = vsyncpa [#allocation8], 1

</llo_original>
